<compile_context>
chip_gen: v6e
topology: v6e:2x2x1
jax: 0.10.0
libtpu: 0.0.40
codegen_flags: <defaults>
</compile_context>

<pallas_src>
import jax
import jax.numpy as jnp
from jax.experimental import pallas as pl
from jax.experimental.pallas import tpu as pltpu

ACT_DTYPE = jnp.bfloat16   # activation storage between kernels (halves HBM traffic)
MM_DTYPE = jnp.bfloat16    # MXU operand dtype (f32 accumulate, f32 epilogue)
COL_TILE = 2048            # max lane tile over the flattened N*L column axis


def _col_tile(nl, cap=COL_TILE):
    """Largest legal lane tile: full dim if small/unaligned, else a 128-multiple dividing nl."""
    if nl <= cap or nl % 128 != 0:
        return nl
    t = cap
    while nl % t != 0:
        t -= 128
    return t


# ----------------------------- Pallas kernels -----------------------------

def _make_conv_kernel(pre_bn, pre_relu, post_relu, add_res):
    """Fused conv kernel: [pre BN] -> [pre ReLU] -> matmul (+bias, post-BN folded into W/b)
    -> [post ReLU] -> [+ residual].

    Blocks:
      x_ref : (K*Cin, T)  im2col columns      w_ref : (Cout, K*Cin) bf16
      b_ref : (Cout, 1)   f32 bias            ps/pt : (K*Cin, 1) f32 pre-BN scale/shift
      r_ref : (Cout, T)   residual            o_ref : (Cout, T)
    """
    def kernel(*refs):
        i = 0
        x_ref = refs[i]; i += 1
        w_ref = refs[i]; i += 1
        b_ref = refs[i]; i += 1
        ps_ref = pt_ref = r_ref = None
        if pre_bn:
            ps_ref = refs[i]; i += 1
            pt_ref = refs[i]; i += 1
        if add_res:
            r_ref = refs[i]; i += 1
        o_ref = refs[i]

        x = x_ref[...]
        if pre_bn or pre_relu:
            xf = x.astype(jnp.float32)
            if pre_bn:
                xf = xf * ps_ref[...] + pt_ref[...]
            if pre_relu:
                xf = jnp.maximum(xf, 0.0)
            x = xf.astype(MM_DTYPE)

        acc = jnp.dot(w_ref[...], x, preferred_element_type=jnp.float32)
        acc = acc + b_ref[...]
        if post_relu:
            acc = jnp.maximum(acc, 0.0)
        if add_res:
            acc = acc + r_ref[...].astype(jnp.float32)
        o_ref[...] = acc.astype(o_ref.dtype)

    return kernel


def _scale_shift_relu_kernel(x_ref, s_ref, t_ref, o_ref):
    """y = relu(x * s + t), per-row (channel) scale/shift; x block (C, T)."""
    y = x_ref[...].astype(jnp.float32) * s_ref[...] + t_ref[...]
    o_ref[...] = jnp.maximum(y, 0.0).astype(o_ref.dtype)


def _max_k_kernel(*refs):
    """Elementwise max over k pool-tap input blocks."""
    o_ref = refs[-1]
    acc = refs[0][...]
    for r in refs[1:-1]:
        acc = jnp.maximum(acc, r[...])
    o_ref[...] = acc


# ----------------------------- op wrappers -----------------------------

def conv_fused(x_cm, w, b, *, stride=1,
               pre_scale=None, pre_shift=None, pre_relu=False,
               post_scale=None, post_shift=None, post_relu=False,
               residual=None, out_dtype=ACT_DTYPE):
    """MyConv1dPadSame (groups=1) fused with optional pre-BN+ReLU, folded post-BN,
    post-ReLU and residual add.  x_cm: (Cin, N, L) channel-major.  Returns (Cout, N, Lout).
    """
    Cin, N, L = x_cm.shape
    Cout, _, K = w.shape
    Lout = (L + stride - 1) // stride
    p = max(0, (Lout - 1) * stride + K - L)
    pad_l, pad_r = p // 2, p - p // 2
    xp = jnp.pad(x_cm, ((0, 0), (0, 0), (pad_l, pad_r)))

    # im2col without transposes: rows ordered (k-major, cin), cols ordered (n-major, lout)
    taps = [jax.lax.slice(xp, (0, 0, k),
                          (Cin, N, k + (Lout - 1) * stride + 1),
                          (1, 1, stride)) for k in range(K)]
    NL = N * Lout
    xim = jnp.concatenate(taps, axis=0).reshape(K * Cin, NL).astype(MM_DTYPE)

    # Fold the BN that follows the conv into weights/bias (exact: ReLU comes after).
    w2 = jnp.transpose(w, (0, 2, 1)).reshape(Cout, K * Cin).astype(jnp.float32)
    b2 = b.astype(jnp.float32)
    if post_scale is not None:
        w2 = w2 * post_scale[:, None]
        b2 = post_scale * b2 + post_shift
    w2 = w2.astype(MM_DTYPE)
    b2 = b2.reshape(Cout, 1)

    pre_bn = pre_scale is not None
    add_res = residual is not None

    T = _col_tile(NL)
    args = [xim, w2, b2]
    in_specs = [
        pl.BlockSpec((K * Cin, T), lambda j: (0, j)),
        pl.BlockSpec((Cout, K * Cin), lambda j: (0, 0)),
        pl.BlockSpec((Cout, 1), lambda j: (0, 0)),
    ]
    if pre_bn:
        ps = jnp.tile(pre_scale.astype(jnp.float32), K).reshape(K * Cin, 1)
        pt = jnp.tile(pre_shift.astype(jnp.float32), K).reshape(K * Cin, 1)
        args += [ps, pt]
        in_specs += [pl.BlockSpec((K * Cin, 1), lambda j: (0, 0)),
                     pl.BlockSpec((K * Cin, 1), lambda j: (0, 0))]
    if add_res:
        args.append(residual.reshape(Cout, NL))
        in_specs.append(pl.BlockSpec((Cout, T), lambda j: (0, j)))

    out2 = pl.pallas_call(
        _make_conv_kernel(pre_bn, pre_relu, post_relu, add_res),
        grid=(NL // T,),
        in_specs=in_specs,
        out_specs=pl.BlockSpec((Cout, T), lambda j: (0, j)),
        out_shape=jax.ShapeDtypeStruct((Cout, NL), out_dtype),
        compiler_params=pltpu.CompilerParams(
            dimension_semantics=("parallel",),
            vmem_limit_bytes=32 * 1024 * 1024),
    )(*args)
    return out2.reshape(Cout, N, Lout)


def bn_relu_cm(x_cm, scale, shift, out_dtype=jnp.float32):
    """y = relu(x * scale + shift), per-channel; x_cm (C, N, L) channel-major."""
    C, N, L = x_cm.shape
    NL = N * L
    T = _col_tile(NL)
    y = pl.pallas_call(
        _scale_shift_relu_kernel,
        grid=(NL // T,),
        in_specs=[pl.BlockSpec((C, T), lambda j: (0, j)),
                  pl.BlockSpec((C, 1), lambda j: (0, 0)),
                  pl.BlockSpec((C, 1), lambda j: (0, 0))],
        out_specs=pl.BlockSpec((C, T), lambda j: (0, j)),
        out_shape=jax.ShapeDtypeStruct((C, NL), out_dtype),
        compiler_params=pltpu.CompilerParams(dimension_semantics=("parallel",)),
    )(x_cm.reshape(C, NL),
      scale.reshape(C, 1).astype(jnp.float32),
      shift.reshape(C, 1).astype(jnp.float32))
    return y.reshape(C, N, L)


def maxpool_same_cm(x_cm, kernel_size):
    """MyMaxPool1dPadSame (pads with 0 as in the reference, pool stride == kernel_size)."""
    if kernel_size <= 1:
        return x_cm
    C, N, L = x_cm.shape
    k = kernel_size
    p = max(0, (L - 1) + k - L)          # padding formula uses stride=1
    pad_l, pad_r = p // 2, p - p // 2
    xp = jnp.pad(x_cm, ((0, 0), (0, 0), (pad_l, pad_r)))   # constant 0 (matches F.pad)
    Lp = L + p
    Lout = (Lp - k) // k + 1
    # k strided tap slices (no stacked (Kp, ...) tensor); elementwise max in the kernel.
    taps = [jax.lax.slice(xp, (0, 0, j),
                          (C, N, j + (Lout - 1) * k + 1),
                          (1, 1, k)).reshape(C, N * Lout) for j in range(k)]
    NL = N * Lout
    T = _col_tile(NL)
    y = pl.pallas_call(
        _max_k_kernel,
        grid=(NL // T,),
        in_specs=[pl.BlockSpec((C, T), lambda j: (0, j)) for _ in range(k)],
        out_specs=pl.BlockSpec((C, T), lambda j: (0, j)),
        out_shape=jax.ShapeDtypeStruct((C, NL), x_cm.dtype),
        compiler_params=pltpu.CompilerParams(dimension_semantics=("parallel",)),
    )(*taps)
    return y.reshape(C, N, Lout)


# ----------------------------- parameter initialization -----------------------------

def init_params(key, in_channels, base_filters, kernel_size, n_block,
                downsample_gap, increasefilter_gap):
    keys = iter(jax.random.split(key, 256))

    def conv_params(cin, cout, k):
        bound = 1.0 / float(cin * k) ** 0.5
        w = jax.random.uniform(next(keys), (cout, cin, k), jnp.float32, -bound, bound)
        b = jax.random.uniform(next(keys), (cout,), jnp.float32, -bound, bound)
        return w, b

    def bn_params(c):
        eps = 1e-5
        gamma = jax.random.uniform(next(keys), (c,), jnp.float32, 0.5, 1.5)
        beta = jax.random.uniform(next(keys), (c,), jnp.float32, -0.5, 0.5)
        mean = jax.random.uniform(next(keys), (c,), jnp.float32, -0.5, 0.5)
        var = jax.random.uniform(next(keys), (c,), jnp.float32, 0.5, 1.5)
        scale = gamma / jnp.sqrt(var + eps)
        shift = beta - mean * scale
        return scale, shift

    params = {
        "first_conv": conv_params(in_channels, base_filters, kernel_size),
        "first_bn": bn_params(base_filters),
        "blocks": [],
    }
    cfg = []
    out_ch = base_filters
    for i_block in range(n_block):
        is_first = i_block == 0
        downsample = (i_block % downsample_gap == 1)
        if is_first:
            cin = base_filters
            cout = cin
        else:
            cin = int(base_filters * 2 ** ((i_block - 1) // increasefilter_gap))
            if i_block % increasefilter_gap == 0 and i_block != 0:
                cout = cin * 2
            else:
                cout = cin
        cfg.append({"in": cin, "out": cout,
                    "is_first": is_first, "downsample": downsample})
        params["blocks"].append({
            "bn1": bn_params(cin),
            "conv1": conv_params(cin, cout, kernel_size),
            "bn2": bn_params(cout),
            "conv2": conv_params(cout, cout, kernel_size),
        })
        out_ch = cout
    params["final_bn"] = bn_params(out_ch)
    return params, cfg


# ----------------------------- forward pass -----------------------------

def basic_block_forward(blk_params, blk_cfg, x_cm, kernel_size, stride, use_bn, use_do):
    identity = x_cm
    s = stride if blk_cfg["downsample"] else 1
    is_first = blk_cfg["is_first"]

    # bn1 + relu1 + (do1 = identity) + conv1 + bn2 + relu2 + (do2 = identity): ONE kernel
    pre_relu = not is_first
    pre_scale = pre_shift = None
    if pre_relu and use_bn:
        pre_scale, pre_shift = blk_params["bn1"]
    post_scale = post_shift = None
    if use_bn:
        post_scale, post_shift = blk_params["bn2"]
    out = conv_fused(x_cm, *blk_params["conv1"], stride=s,
                     pre_scale=pre_scale, pre_shift=pre_shift, pre_relu=pre_relu,
                     post_scale=post_scale, post_shift=post_shift, post_relu=True)

    # residual path
    if blk_cfg["downsample"]:
        identity = maxpool_same_cm(identity, s)
    cin, cout = blk_cfg["in"], blk_cfg["out"]
    if cout != cin:
        ch1 = (cout - cin) // 2
        ch2 = cout - cin - ch1
        identity = jnp.pad(identity, ((ch1, ch2), (0, 0), (0, 0)))

    # conv2 with the residual add fused into its epilogue (no activation after, as in torch)
    out = conv_fused(out, *blk_params["conv2"], stride=1, residual=identity)
    return out


def resnet_backbone_forward(params, cfg, x, *, kernel_size, stride,
                            use_bn=True, use_do=True):
    """x: (N, Cin, L) in PyTorch NCL layout. Returns (N, Cout, Lfinal) float32."""
    x_cm = jnp.transpose(x, (1, 0, 2)).astype(ACT_DTYPE)   # channel-major (C, N, L)

    fs, ft = params["first_bn"] if use_bn else (None, None)
    out = conv_fused(x_cm, *params["first_conv"], stride=1,
                     post_scale=fs, post_shift=ft, post_relu=True)

    for blk_params, blk_cfg in zip(params["blocks"], cfg):
        out = basic_block_forward(blk_params, blk_cfg, out,
                                  kernel_size, stride, use_bn, use_do)

    if use_bn:
        out = bn_relu_cm(out, *params["final_bn"], out_dtype=jnp.float32)
    else:
        C = out.shape[0]
        out = bn_relu_cm(out, jnp.ones((C,), jnp.float32),
                         jnp.zeros((C,), jnp.float32), out_dtype=jnp.float32)
    return jnp.transpose(out, (1, 0, 2))   # back to (N, C, L)


# ----------------------------- main -----------------------------

if __name__ == "__main__":
    key = jax.random.PRNGKey(0)
    k_x, k_p = jax.random.split(key)

    # small but representative config
    N, in_channels, L = 2, 4, 64
    base_filters, kernel_size, stride, groups = 8, 3, 2, 1
    n_block, downsample_gap, increasefilter_gap = 4, 2, 2

    x = jax.random.normal(k_x, (N, in_channels, L), jnp.float32)
    params, cfg = init_params(k_p, in_channels, base_filters, kernel_size,
                              n_block, downsample_gap, increasefilter_gap)

    fwd = jax.jit(lambda p, inp: resnet_backbone_forward(
        p, cfg, inp, kernel_size=kernel_size, stride=stride,
        use_bn=True, use_do=True))

    out = fwd(params, x)
    jax.block_until_ready(out)
    assert out.shape == (N, 16, 16), out.shape   # (N, final_channels, L / 4)
    assert bool(jnp.isfinite(out).all())
    print("KERNEL_OK")
</pallas_src>

<mosaic_0001>
module attributes {stable_mosaic.version = 11 : i64} {
  func.func @kernel(%arg0: i32, %arg1: memref<12x128xbf16, #tpu.memory_space<vmem>>, %arg2: memref<8x12xbf16, #tpu.memory_space<vmem>>, %arg3: memref<8x1xf32, #tpu.memory_space<vmem>>, %arg4: memref<8x128xbf16, #tpu.memory_space<vmem>>) attributes {dimension_semantics = [#tpu.dimension_semantics<parallel>], iteration_bounds = array<i64: 1>, scalar_prefetch = 0 : i64, scratch_operands = 0 : i64, tpu.core_type = #tpu.core_type<tc>, window_params = [{transform_indices = @transform_0, window_bounds = array<i64: 12, 128>}, {pipeline_mode = #tpu.pipeline_mode<synchronous>, transform_indices = @transform_1, window_bounds = array<i64: 8, 12>}, {pipeline_mode = #tpu.pipeline_mode<synchronous>, transform_indices = @transform_2, window_bounds = array<i64: 8, 1>}, {transform_indices = @transform_3, window_bounds = array<i64: 8, 128>}]} {
    %c0 = arith.constant 0 : index
    %c0_0 = arith.constant 0 : index
    %0 = vector.load %arg1[%c0, %c0_0] : memref<12x128xbf16, #tpu.memory_space<vmem>>, vector<12x128xbf16>
    %c0_1 = arith.constant 0 : index
    %c0_2 = arith.constant 0 : index
    %1 = vector.load %arg2[%c0_1, %c0_2] : memref<8x12xbf16, #tpu.memory_space<vmem>>, vector<8x12xbf16>
    %cst = arith.constant dense<0.000000e+00> : vector<8x128xf32>
    %2 = tpu.matmul %1, %0, %cst {dimension_numbers = #tpu.dot_dimension_numbers<[1], [0], [0], [1], [0, 0, 1, 1], [], []>} : vector<8x12xbf16>, vector<12x128xbf16>, vector<8x128xf32> -> vector<8x128xf32>
    %c0_3 = arith.constant 0 : index
    %c0_4 = arith.constant 0 : index
    %3 = vector.load %arg3[%c0_3, %c0_4] : memref<8x1xf32, #tpu.memory_space<vmem>>, vector<8x1xf32>
    %4 = vector.broadcast %3 : vector<8x1xf32> to vector<8x128xf32>
    %5 = arith.addf %2, %4 : vector<8x128xf32>
    %cst_5 = arith.constant 0.000000e+00 : f32
    %6 = vector.broadcast %cst_5 : f32 to vector<8x128xf32>
    %7 = arith.maximumf %5, %6 : vector<8x128xf32>
    %8 = arith.truncf %7 : vector<8x128xf32> to vector<8x128xbf16>
    %c0_6 = arith.constant 0 : index
    %c0_7 = arith.constant 0 : index
    %9 = vector.load %arg4[%c0_6, %c0_7] : memref<8x128xbf16, #tpu.memory_space<vmem>>, vector<8x128xbf16>
    tpu.vector_store %arg4[%c0_6, %c0_7], %8 {strides = array<i32>} : memref<8x128xbf16, #tpu.memory_space<vmem>>, vector<8x128xbf16>,
    return
  }
  func.func @transform_0(%arg0: i32) -> (i32, i32) {
    %c0_i32 = arith.constant 0 : i32
    %c0_i32_0 = arith.constant 0 : i32
    return %c0_i32, %arg0 : i32, i32
  }
  func.func @transform_1(%arg0: i32) -> (i32, i32) {
    %c0_i32 = arith.constant 0 : i32
    %c0_i32_0 = arith.constant 0 : i32
    %c0_i32_1 = arith.constant 0 : i32
    return %c0_i32, %c0_i32_0 : i32, i32
  }
  func.func @transform_2(%arg0: i32) -> (i32, i32) {
    %c0_i32 = arith.constant 0 : i32
    %c0_i32_0 = arith.constant 0 : i32
    %c0_i32_1 = arith.constant 0 : i32
    return %c0_i32, %c0_i32_0 : i32, i32
  }
  func.func @transform_3(%arg0: i32) -> (i32, i32) {
    %c0_i32 = arith.constant 0 : i32
    %c0_i32_0 = arith.constant 0 : i32
    return %c0_i32, %arg0 : i32, i32
  }
}

module attributes {stable_mosaic.version = 11 : i64} {
  func.func @kernel(%arg0: i32, %arg1: memref<24x128xbf16, #tpu.memory_space<vmem>>, %arg2: memref<8x24xbf16, #tpu.memory_space<vmem>>, %arg3: memref<8x1xf32, #tpu.memory_space<vmem>>, %arg4: memref<8x128xbf16, #tpu.memory_space<vmem>>) attributes {dimension_semantics = [#tpu.dimension_semantics<parallel>], iteration_bounds = array<i64: 1>, scalar_prefetch = 0 : i64, scratch_operands = 0 : i64, tpu.core_type = #tpu.core_type<tc>, window_params = [{transform_indices = @transform_0, window_bounds = array<i64: 24, 128>}, {pipeline_mode = #tpu.pipeline_mode<synchronous>, transform_indices = @transform_1, window_bounds = array<i64: 8, 24>}, {pipeline_mode = #tpu.pipeline_mode<synchronous>, transform_indices = @transform_2, window_bounds = array<i64: 8, 1>}, {transform_indices = @transform_3, window_bounds = array<i64: 8, 128>}]} {
    %c0 = arith.constant 0 : index
    %c0_0 = arith.constant 0 : index
    %0 = vector.load %arg1[%c0, %c0_0] : memref<24x128xbf16, #tpu.memory_space<vmem>>, vector<24x128xbf16>
    %c0_1 = arith.constant 0 : index
    %c0_2 = arith.constant 0 : index
    %1 = vector.load %arg2[%c0_1, %c0_2] : memref<8x24xbf16, #tpu.memory_space<vmem>>, vector<8x24xbf16>
    %cst = arith.constant dense<0.000000e+00> : vector<8x128xf32>
    %2 = tpu.matmul %1, %0, %cst {dimension_numbers = #tpu.dot_dimension_numbers<[1], [0], [0], [1], [0, 0, 1, 1], [], []>} : vector<8x24xbf16>, vector<24x128xbf16>, vector<8x128xf32> -> vector<8x128xf32>
    %c0_3 = arith.constant 0 : index
    %c0_4 = arith.constant 0 : index
    %3 = vector.load %arg3[%c0_3, %c0_4] : memref<8x1xf32, #tpu.memory_space<vmem>>, vector<8x1xf32>
    %4 = vector.broadcast %3 : vector<8x1xf32> to vector<8x128xf32>
    %5 = arith.addf %2, %4 : vector<8x128xf32>
    %cst_5 = arith.constant 0.000000e+00 : f32
    %6 = vector.broadcast %cst_5 : f32 to vector<8x128xf32>
    %7 = arith.maximumf %5, %6 : vector<8x128xf32>
    %8 = arith.truncf %7 : vector<8x128xf32> to vector<8x128xbf16>
    %c0_6 = arith.constant 0 : index
    %c0_7 = arith.constant 0 : index
    %9 = vector.load %arg4[%c0_6, %c0_7] : memref<8x128xbf16, #tpu.memory_space<vmem>>, vector<8x128xbf16>
    tpu.vector_store %arg4[%c0_6, %c0_7], %8 {strides = array<i32>} : memref<8x128xbf16, #tpu.memory_space<vmem>>, vector<8x128xbf16>,
    return
  }
  func.func @transform_0(%arg0: i32) -> (i32, i32) {
    %c0_i32 = arith.constant 0 : i32
    %c0_i32_0 = arith.constant 0 : i32
    return %c0_i32, %arg0 : i32, i32
  }
  func.func @transform_1(%arg0: i32) -> (i32, i32) {
    %c0_i32 = arith.constant 0 : i32
    %c0_i32_0 = arith.constant 0 : i32
    %c0_i32_1 = arith.constant 0 : i32
    return %c0_i32, %c0_i32_0 : i32, i32
  }
  func.func @transform_2(%arg0: i32) -> (i32, i32) {
    %c0_i32 = arith.constant 0 : i32
    %c0_i32_0 = arith.constant 0 : i32
    %c0_i32_1 = arith.constant 0 : i32
    return %c0_i32, %c0_i32_0 : i32, i32
  }
  func.func @transform_3(%arg0: i32) -> (i32, i32) {
    %c0_i32 = arith.constant 0 : i32
    %c0_i32_0 = arith.constant 0 : i32
    return %c0_i32, %arg0 : i32, i32
  }
}

module attributes {stable_mosaic.version = 11 : i64} {
  func.func @kernel(%arg0: i32, %arg1: memref<24x128xbf16, #tpu.memory_space<vmem>>, %arg2: memref<8x24xbf16, #tpu.memory_space<vmem>>, %arg3: memref<8x1xf32, #tpu.memory_space<vmem>>, %arg4: memref<8x128xbf16, #tpu.memory_space<vmem>>, %arg5: memref<8x128xbf16, #tpu.memory_space<vmem>>) attributes {dimension_semantics = [#tpu.dimension_semantics<parallel>], iteration_bounds = array<i64: 1>, scalar_prefetch = 0 : i64, scratch_operands = 0 : i64, tpu.core_type = #tpu.core_type<tc>, window_params = [{transform_indices = @transform_0, window_bounds = array<i64: 24, 128>}, {pipeline_mode = #tpu.pipeline_mode<synchronous>, transform_indices = @transform_1, window_bounds = array<i64: 8, 24>}, {pipeline_mode = #tpu.pipeline_mode<synchronous>, transform_indices = @transform_2, window_bounds = array<i64: 8, 1>}, {transform_indices = @transform_3, window_bounds = array<i64: 8, 128>}, {transform_indices = @transform_4, window_bounds = array<i64: 8, 128>}]} {
    %c0 = arith.constant 0 : index
    %c0_0 = arith.constant 0 : index
    %0 = vector.load %arg1[%c0, %c0_0] : memref<24x128xbf16, #tpu.memory_space<vmem>>, vector<24x128xbf16>
    %c0_1 = arith.constant 0 : index
    %c0_2 = arith.constant 0 : index
    %1 = vector.load %arg2[%c0_1, %c0_2] : memref<8x24xbf16, #tpu.memory_space<vmem>>, vector<8x24xbf16>
    %cst = arith.constant dense<0.000000e+00> : vector<8x128xf32>
    %2 = tpu.matmul %1, %0, %cst {dimension_numbers = #tpu.dot_dimension_numbers<[1], [0], [0], [1], [0, 0, 1, 1], [], []>} : vector<8x24xbf16>, vector<24x128xbf16>, vector<8x128xf32> -> vector<8x128xf32>
    %c0_3 = arith.constant 0 : index
    %c0_4 = arith.constant 0 : index
    %3 = vector.load %arg3[%c0_3, %c0_4] : memref<8x1xf32, #tpu.memory_space<vmem>>, vector<8x1xf32>
    %4 = vector.broadcast %3 : vector<8x1xf32> to vector<8x128xf32>
    %5 = arith.addf %2, %4 : vector<8x128xf32>
    %c0_5 = arith.constant 0 : index
    %c0_6 = arith.constant 0 : index
    %6 = vector.load %arg4[%c0_5, %c0_6] : memref<8x128xbf16, #tpu.memory_space<vmem>>, vector<8x128xbf16>
    %7 = arith.extf %6 : vector<8x128xbf16> to vector<8x128xf32>
    %8 = arith.addf %5, %7 : vector<8x128xf32>
    %9 = arith.truncf %8 : vector<8x128xf32> to vector<8x128xbf16>
    %c0_7 = arith.constant 0 : index
    %c0_8 = arith.constant 0 : index
    %10 = vector.load %arg5[%c0_7, %c0_8] : memref<8x128xbf16, #tpu.memory_space<vmem>>, vector<8x128xbf16>
    tpu.vector_store %arg5[%c0_7, %c0_8], %9 {strides = array<i32>} : memref<8x128xbf16, #tpu.memory_space<vmem>>, vector<8x128xbf16>,
    return
  }
  func.func @transform_0(%arg0: i32) -> (i32, i32) {
    %c0_i32 = arith.constant 0 : i32
    %c0_i32_0 = arith.constant 0 : i32
    return %c0_i32, %arg0 : i32, i32
  }
  func.func @transform_1(%arg0: i32) -> (i32, i32) {
    %c0_i32 = arith.constant 0 : i32
    %c0_i32_0 = arith.constant 0 : i32
    %c0_i32_1 = arith.constant 0 : i32
    return %c0_i32, %c0_i32_0 : i32, i32
  }
  func.func @transform_2(%arg0: i32) -> (i32, i32) {
    %c0_i32 = arith.constant 0 : i32
    %c0_i32_0 = arith.constant 0 : i32
    %c0_i32_1 = arith.constant 0 : i32
    return %c0_i32, %c0_i32_0 : i32, i32
  }
  func.func @transform_3(%arg0: i32) -> (i32, i32) {
    %c0_i32 = arith.constant 0 : i32
    %c0_i32_0 = arith.constant 0 : i32
    return %c0_i32, %arg0 : i32, i32
  }
  func.func @transform_4(%arg0: i32) -> (i32, i32) {
    %c0_i32 = arith.constant 0 : i32
    %c0_i32_0 = arith.constant 0 : i32
    return %c0_i32, %arg0 : i32, i32
  }
}

module attributes {stable_mosaic.version = 11 : i64} {
  func.func @kernel(%arg0: i32, %arg1: memref<24x64xbf16, #tpu.memory_space<vmem>>, %arg2: memref<8x24xbf16, #tpu.memory_space<vmem>>, %arg3: memref<8x1xf32, #tpu.memory_space<vmem>>, %arg4: memref<24x1xf32, #tpu.memory_space<vmem>>, %arg5: memref<24x1xf32, #tpu.memory_space<vmem>>, %arg6: memref<8x64xbf16, #tpu.memory_space<vmem>>) attributes {dimension_semantics = [#tpu.dimension_semantics<parallel>], iteration_bounds = array<i64: 1>, scalar_prefetch = 0 : i64, scratch_operands = 0 : i64, tpu.core_type = #tpu.core_type<tc>, window_params = [{transform_indices = @transform_0, window_bounds = array<i64: 24, 64>}, {pipeline_mode = #tpu.pipeline_mode<synchronous>, transform_indices = @transform_1, window_bounds = array<i64: 8, 24>}, {pipeline_mode = #tpu.pipeline_mode<synchronous>, transform_indices = @transform_2, window_bounds = array<i64: 8, 1>}, {pipeline_mode = #tpu.pipeline_mode<synchronous>, transform_indices = @transform_3, window_bounds = array<i64: 24, 1>}, {pipeline_mode = #tpu.pipeline_mode<synchronous>, transform_indices = @transform_4, window_bounds = array<i64: 24, 1>}, {transform_indices = @transform_5, window_bounds = array<i64: 8, 64>}]} {
    %c0 = arith.constant 0 : index
    %c0_0 = arith.constant 0 : index
    %0 = vector.load %arg1[%c0, %c0_0] : memref<24x64xbf16, #tpu.memory_space<vmem>>, vector<24x64xbf16>
    %1 = arith.extf %0 : vector<24x64xbf16> to vector<24x64xf32>
    %c0_1 = arith.constant 0 : index
    %c0_2 = arith.constant 0 : index
    %2 = vector.load %arg4[%c0_1, %c0_2] : memref<24x1xf32, #tpu.memory_space<vmem>>, vector<24x1xf32>
    %3 = vector.broadcast %2 : vector<24x1xf32> to vector<24x64xf32>
    %4 = arith.mulf %1, %3 : vector<24x64xf32>
    %c0_3 = arith.constant 0 : index
    %c0_4 = arith.constant 0 : index
    %5 = vector.load %arg5[%c0_3, %c0_4] : memref<24x1xf32, #tpu.memory_space<vmem>>, vector<24x1xf32>
    %6 = vector.broadcast %5 : vector<24x1xf32> to vector<24x64xf32>
    %7 = arith.addf %4, %6 : vector<24x64xf32>
    %cst = arith.constant 0.000000e+00 : f32
    %8 = vector.broadcast %cst : f32 to vector<24x64xf32>
    %9 = arith.maximumf %7, %8 : vector<24x64xf32>
    %10 = arith.truncf %9 : vector<24x64xf32> to vector<24x64xbf16>
    %c0_5 = arith.constant 0 : index
    %c0_6 = arith.constant 0 : index
    %11 = vector.load %arg2[%c0_5, %c0_6] : memref<8x24xbf16, #tpu.memory_space<vmem>>, vector<8x24xbf16>
    %cst_7 = arith.constant dense<0.000000e+00> : vector<8x64xf32>
    %12 = tpu.matmul %11, %10, %cst_7 {dimension_numbers = #tpu.dot_dimension_numbers<[1], [0], [0], [1], [0, 0, 1, 1], [], []>} : vector<8x24xbf16>, vector<24x64xbf16>, vector<8x64xf32> -> vector<8x64xf32>
    %c0_8 = arith.constant 0 : index
    %c0_9 = arith.constant 0 : index
    %13 = vector.load %arg3[%c0_8, %c0_9] : memref<8x1xf32, #tpu.memory_space<vmem>>, vector<8x1xf32>
    %14 = vector.broadcast %13 : vector<8x1xf32> to vector<8x64xf32>
    %15 = arith.addf %12, %14 : vector<8x64xf32>
    %cst_10 = arith.constant 0.000000e+00 : f32
    %16 = vector.broadcast %cst_10 : f32 to vector<8x64xf32>
    %17 = arith.maximumf %15, %16 : vector<8x64xf32>
    %18 = arith.truncf %17 : vector<8x64xf32> to vector<8x64xbf16>
    %c0_11 = arith.constant 0 : index
    %c0_12 = arith.constant 0 : index
    %19 = vector.load %arg6[%c0_11, %c0_12] : memref<8x64xbf16, #tpu.memory_space<vmem>>, vector<8x64xbf16>
    tpu.vector_store %arg6[%c0_11, %c0_12], %18 {strides = array<i32>} : memref<8x64xbf16, #tpu.memory_space<vmem>>, vector<8x64xbf16>,
    return
  }
  func.func @transform_0(%arg0: i32) -> (i32, i32) {
    %c0_i32 = arith.constant 0 : i32
    %c0_i32_0 = arith.constant 0 : i32
    return %c0_i32, %arg0 : i32, i32
  }
  func.func @transform_1(%arg0: i32) -> (i32, i32) {
    %c0_i32 = arith.constant 0 : i32
    %c0_i32_0 = arith.constant 0 : i32
    %c0_i32_1 = arith.constant 0 : i32
    return %c0_i32, %c0_i32_0 : i32, i32
  }
  func.func @transform_2(%arg0: i32) -> (i32, i32) {
    %c0_i32 = arith.constant 0 : i32
    %c0_i32_0 = arith.constant 0 : i32
    %c0_i32_1 = arith.constant 0 : i32
    return %c0_i32, %c0_i32_0 : i32, i32
  }
  func.func @transform_3(%arg0: i32) -> (i32, i32) {
    %c0_i32 = arith.constant 0 : i32
    %c0_i32_0 = arith.constant 0 : i32
    %c0_i32_1 = arith.constant 0 : i32
    return %c0_i32, %c0_i32_0 : i32, i32
  }
  func.func @transform_4(%arg0: i32) -> (i32, i32) {
    %c0_i32 = arith.constant 0 : i32
    %c0_i32_0 = arith.constant 0 : i32
    %c0_i32_1 = arith.constant 0 : i32
    return %c0_i32, %c0_i32_0 : i32, i32
  }
  func.func @transform_5(%arg0: i32) -> (i32, i32) {
    %c0_i32 = arith.constant 0 : i32
    %c0_i32_0 = arith.constant 0 : i32
    return %c0_i32, %arg0 : i32, i32
  }
}

module attributes {stable_mosaic.version = 11 : i64} {
  func.func @_max_k_kernel(%arg0: i32, %arg1: memref<8x64xbf16, #tpu.memory_space<vmem>>, %arg2: memref<8x64xbf16, #tpu.memory_space<vmem>>, %arg3: memref<8x64xbf16, #tpu.memory_space<vmem>>) attributes {dimension_semantics = [#tpu.dimension_semantics<parallel>], iteration_bounds = array<i64: 1>, scalar_prefetch = 0 : i64, scratch_operands = 0 : i64, tpu.core_type = #tpu.core_type<tc>, window_params = [{transform_indices = @transform_0, window_bounds = array<i64: 8, 64>}, {transform_indices = @transform_1, window_bounds = array<i64: 8, 64>}, {transform_indices = @transform_2, window_bounds = array<i64: 8, 64>}]} {
    %c0 = arith.constant 0 : index
    %c0_0 = arith.constant 0 : index
    %0 = vector.load %arg1[%c0, %c0_0] : memref<8x64xbf16, #tpu.memory_space<vmem>>, vector<8x64xbf16>
    %c0_1 = arith.constant 0 : index
    %c0_2 = arith.constant 0 : index
    %1 = vector.load %arg2[%c0_1, %c0_2] : memref<8x64xbf16, #tpu.memory_space<vmem>>, vector<8x64xbf16>
    %2 = arith.maximumf %0, %1 : vector<8x64xbf16>
    %c0_3 = arith.constant 0 : index
    %c0_4 = arith.constant 0 : index
    %3 = vector.load %arg3[%c0_3, %c0_4] : memref<8x64xbf16, #tpu.memory_space<vmem>>, vector<8x64xbf16>
    tpu.vector_store %arg3[%c0_3, %c0_4], %2 {strides = array<i32>} : memref<8x64xbf16, #tpu.memory_space<vmem>>, vector<8x64xbf16>,
    return
  }
  func.func @transform_0(%arg0: i32) -> (i32, i32) {
    %c0_i32 = arith.constant 0 : i32
    %c0_i32_0 = arith.constant 0 : i32
    return %c0_i32, %arg0 : i32, i32
  }
  func.func @transform_1(%arg0: i32) -> (i32, i32) {
    %c0_i32 = arith.constant 0 : i32
    %c0_i32_0 = arith.constant 0 : i32
    return %c0_i32, %arg0 : i32, i32
  }
  func.func @transform_2(%arg0: i32) -> (i32, i32) {
    %c0_i32 = arith.constant 0 : i32
    %c0_i32_0 = arith.constant 0 : i32
    return %c0_i32, %arg0 : i32, i32
  }
}

module attributes {stable_mosaic.version = 11 : i64} {
  func.func @kernel(%arg0: i32, %arg1: memref<24x64xbf16, #tpu.memory_space<vmem>>, %arg2: memref<8x24xbf16, #tpu.memory_space<vmem>>, %arg3: memref<8x1xf32, #tpu.memory_space<vmem>>, %arg4: memref<8x64xbf16, #tpu.memory_space<vmem>>, %arg5: memref<8x64xbf16, #tpu.memory_space<vmem>>) attributes {dimension_semantics = [#tpu.dimension_semantics<parallel>], iteration_bounds = array<i64: 1>, scalar_prefetch = 0 : i64, scratch_operands = 0 : i64, tpu.core_type = #tpu.core_type<tc>, window_params = [{transform_indices = @transform_0, window_bounds = array<i64: 24, 64>}, {pipeline_mode = #tpu.pipeline_mode<synchronous>, transform_indices = @transform_1, window_bounds = array<i64: 8, 24>}, {pipeline_mode = #tpu.pipeline_mode<synchronous>, transform_indices = @transform_2, window_bounds = array<i64: 8, 1>}, {transform_indices = @transform_3, window_bounds = array<i64: 8, 64>}, {transform_indices = @transform_4, window_bounds = array<i64: 8, 64>}]} {
    %c0 = arith.constant 0 : index
    %c0_0 = arith.constant 0 : index
    %0 = vector.load %arg1[%c0, %c0_0] : memref<24x64xbf16, #tpu.memory_space<vmem>>, vector<24x64xbf16>
    %c0_1 = arith.constant 0 : index
    %c0_2 = arith.constant 0 : index
    %1 = vector.load %arg2[%c0_1, %c0_2] : memref<8x24xbf16, #tpu.memory_space<vmem>>, vector<8x24xbf16>
    %cst = arith.constant dense<0.000000e+00> : vector<8x64xf32>
    %2 = tpu.matmul %1, %0, %cst {dimension_numbers = #tpu.dot_dimension_numbers<[1], [0], [0], [1], [0, 0, 1, 1], [], []>} : vector<8x24xbf16>, vector<24x64xbf16>, vector<8x64xf32> -> vector<8x64xf32>
    %c0_3 = arith.constant 0 : index
    %c0_4 = arith.constant 0 : index
    %3 = vector.load %arg3[%c0_3, %c0_4] : memref<8x1xf32, #tpu.memory_space<vmem>>, vector<8x1xf32>
    %4 = vector.broadcast %3 : vector<8x1xf32> to vector<8x64xf32>
    %5 = arith.addf %2, %4 : vector<8x64xf32>
    %c0_5 = arith.constant 0 : index
    %c0_6 = arith.constant 0 : index
    %6 = vector.load %arg4[%c0_5, %c0_6] : memref<8x64xbf16, #tpu.memory_space<vmem>>, vector<8x64xbf16>
    %7 = arith.extf %6 : vector<8x64xbf16> to vector<8x64xf32>
    %8 = arith.addf %5, %7 : vector<8x64xf32>
    %9 = arith.truncf %8 : vector<8x64xf32> to vector<8x64xbf16>
    %c0_7 = arith.constant 0 : index
    %c0_8 = arith.constant 0 : index
    %10 = vector.load %arg5[%c0_7, %c0_8] : memref<8x64xbf16, #tpu.memory_space<vmem>>, vector<8x64xbf16>
    tpu.vector_store %arg5[%c0_7, %c0_8], %9 {strides = array<i32>} : memref<8x64xbf16, #tpu.memory_space<vmem>>, vector<8x64xbf16>,
    return
  }
  func.func @transform_0(%arg0: i32) -> (i32, i32) {
    %c0_i32 = arith.constant 0 : i32
    %c0_i32_0 = arith.constant 0 : i32
    return %c0_i32, %arg0 : i32, i32
  }
  func.func @transform_1(%arg0: i32) -> (i32, i32) {
    %c0_i32 = arith.constant 0 : i32
    %c0_i32_0 = arith.constant 0 : i32
    %c0_i32_1 = arith.constant 0 : i32
    return %c0_i32, %c0_i32_0 : i32, i32
  }
  func.func @transform_2(%arg0: i32) -> (i32, i32) {
    %c0_i32 = arith.constant 0 : i32
    %c0_i32_0 = arith.constant 0 : i32
    %c0_i32_1 = arith.constant 0 : i32
    return %c0_i32, %c0_i32_0 : i32, i32
  }
  func.func @transform_3(%arg0: i32) -> (i32, i32) {
    %c0_i32 = arith.constant 0 : i32
    %c0_i32_0 = arith.constant 0 : i32
    return %c0_i32, %arg0 : i32, i32
  }
  func.func @transform_4(%arg0: i32) -> (i32, i32) {
    %c0_i32 = arith.constant 0 : i32
    %c0_i32_0 = arith.constant 0 : i32
    return %c0_i32, %arg0 : i32, i32
  }
}

module attributes {stable_mosaic.version = 11 : i64} {
  func.func @kernel(%arg0: i32, %arg1: memref<24x64xbf16, #tpu.memory_space<vmem>>, %arg2: memref<16x24xbf16, #tpu.memory_space<vmem>>, %arg3: memref<16x1xf32, #tpu.memory_space<vmem>>, %arg4: memref<24x1xf32, #tpu.memory_space<vmem>>, %arg5: memref<24x1xf32, #tpu.memory_space<vmem>>, %arg6: memref<16x64xbf16, #tpu.memory_space<vmem>>) attributes {dimension_semantics = [#tpu.dimension_semantics<parallel>], iteration_bounds = array<i64: 1>, scalar_prefetch = 0 : i64, scratch_operands = 0 : i64, tpu.core_type = #tpu.core_type<tc>, window_params = [{transform_indices = @transform_0, window_bounds = array<i64: 24, 64>}, {pipeline_mode = #tpu.pipeline_mode<synchronous>, transform_indices = @transform_1, window_bounds = array<i64: 16, 24>}, {pipeline_mode = #tpu.pipeline_mode<synchronous>, transform_indices = @transform_2, window_bounds = array<i64: 16, 1>}, {pipeline_mode = #tpu.pipeline_mode<synchronous>, transform_indices = @transform_3, window_bounds = array<i64: 24, 1>}, {pipeline_mode = #tpu.pipeline_mode<synchronous>, transform_indices = @transform_4, window_bounds = array<i64: 24, 1>}, {transform_indices = @transform_5, window_bounds = array<i64: 16, 64>}]} {
    %c0 = arith.constant 0 : index
    %c0_0 = arith.constant 0 : index
    %0 = vector.load %arg1[%c0, %c0_0] : memref<24x64xbf16, #tpu.memory_space<vmem>>, vector<24x64xbf16>
    %1 = arith.extf %0 : vector<24x64xbf16> to vector<24x64xf32>
    %c0_1 = arith.constant 0 : index
    %c0_2 = arith.constant 0 : index
    %2 = vector.load %arg4[%c0_1, %c0_2] : memref<24x1xf32, #tpu.memory_space<vmem>>, vector<24x1xf32>
    %3 = vector.broadcast %2 : vector<24x1xf32> to vector<24x64xf32>
    %4 = arith.mulf %1, %3 : vector<24x64xf32>
    %c0_3 = arith.constant 0 : index
    %c0_4 = arith.constant 0 : index
    %5 = vector.load %arg5[%c0_3, %c0_4] : memref<24x1xf32, #tpu.memory_space<vmem>>, vector<24x1xf32>
    %6 = vector.broadcast %5 : vector<24x1xf32> to vector<24x64xf32>
    %7 = arith.addf %4, %6 : vector<24x64xf32>
    %cst = arith.constant 0.000000e+00 : f32
    %8 = vector.broadcast %cst : f32 to vector<24x64xf32>
    %9 = arith.maximumf %7, %8 : vector<24x64xf32>
    %10 = arith.truncf %9 : vector<24x64xf32> to vector<24x64xbf16>
    %c0_5 = arith.constant 0 : index
    %c0_6 = arith.constant 0 : index
    %11 = vector.load %arg2[%c0_5, %c0_6] : memref<16x24xbf16, #tpu.memory_space<vmem>>, vector<16x24xbf16>
    %cst_7 = arith.constant dense<0.000000e+00> : vector<16x64xf32>
    %12 = tpu.matmul %11, %10, %cst_7 {dimension_numbers = #tpu.dot_dimension_numbers<[1], [0], [0], [1], [0, 0, 1, 1], [], []>} : vector<16x24xbf16>, vector<24x64xbf16>, vector<16x64xf32> -> vector<16x64xf32>
    %c0_8 = arith.constant 0 : index
    %c0_9 = arith.constant 0 : index
    %13 = vector.load %arg3[%c0_8, %c0_9] : memref<16x1xf32, #tpu.memory_space<vmem>>, vector<16x1xf32>
    %14 = vector.broadcast %13 : vector<16x1xf32> to vector<16x64xf32>
    %15 = arith.addf %12, %14 : vector<16x64xf32>
    %cst_10 = arith.constant 0.000000e+00 : f32
    %16 = vector.broadcast %cst_10 : f32 to vector<16x64xf32>
    %17 = arith.maximumf %15, %16 : vector<16x64xf32>
    %18 = arith.truncf %17 : vector<16x64xf32> to vector<16x64xbf16>
    %c0_11 = arith.constant 0 : index
    %c0_12 = arith.constant 0 : index
    %19 = vector.load %arg6[%c0_11, %c0_12] : memref<16x64xbf16, #tpu.memory_space<vmem>>, vector<16x64xbf16>
    tpu.vector_store %arg6[%c0_11, %c0_12], %18 {strides = array<i32>} : memref<16x64xbf16, #tpu.memory_space<vmem>>, vector<16x64xbf16>,
    return
  }
  func.func @transform_0(%arg0: i32) -> (i32, i32) {
    %c0_i32 = arith.constant 0 : i32
    %c0_i32_0 = arith.constant 0 : i32
    return %c0_i32, %arg0 : i32, i32
  }
  func.func @transform_1(%arg0: i32) -> (i32, i32) {
    %c0_i32 = arith.constant 0 : i32
    %c0_i32_0 = arith.constant 0 : i32
    %c0_i32_1 = arith.constant 0 : i32
    return %c0_i32, %c0_i32_0 : i32, i32
  }
  func.func @transform_2(%arg0: i32) -> (i32, i32) {
    %c0_i32 = arith.constant 0 : i32
    %c0_i32_0 = arith.constant 0 : i32
    %c0_i32_1 = arith.constant 0 : i32
    return %c0_i32, %c0_i32_0 : i32, i32
  }
  func.func @transform_3(%arg0: i32) -> (i32, i32) {
    %c0_i32 = arith.constant 0 : i32
    %c0_i32_0 = arith.constant 0 : i32
    %c0_i32_1 = arith.constant 0 : i32
    return %c0_i32, %c0_i32_0 : i32, i32
  }
  func.func @transform_4(%arg0: i32) -> (i32, i32) {
    %c0_i32 = arith.constant 0 : i32
    %c0_i32_0 = arith.constant 0 : i32
    %c0_i32_1 = arith.constant 0 : i32
    return %c0_i32, %c0_i32_0 : i32, i32
  }
  func.func @transform_5(%arg0: i32) -> (i32, i32) {
    %c0_i32 = arith.constant 0 : i32
    %c0_i32_0 = arith.constant 0 : i32
    return %c0_i32, %arg0 : i32, i32
  }
}

module attributes {stable_mosaic.version = 11 : i64} {
  func.func @kernel(%arg0: i32, %arg1: memref<48x64xbf16, #tpu.memory_space<vmem>>, %arg2: memref<16x48xbf16, #tpu.memory_space<vmem>>, %arg3: memref<16x1xf32, #tpu.memory_space<vmem>>, %arg4: memref<16x64xbf16, #tpu.memory_space<vmem>>, %arg5: memref<16x64xbf16, #tpu.memory_space<vmem>>) attributes {dimension_semantics = [#tpu.dimension_semantics<parallel>], iteration_bounds = array<i64: 1>, scalar_prefetch = 0 : i64, scratch_operands = 0 : i64, tpu.core_type = #tpu.core_type<tc>, window_params = [{transform_indices = @transform_0, window_bounds = array<i64: 48, 64>}, {pipeline_mode = #tpu.pipeline_mode<synchronous>, transform_indices = @transform_1, window_bounds = array<i64: 16, 48>}, {pipeline_mode = #tpu.pipeline_mode<synchronous>, transform_indices = @transform_2, window_bounds = array<i64: 16, 1>}, {transform_indices = @transform_3, window_bounds = array<i64: 16, 64>}, {transform_indices = @transform_4, window_bounds = array<i64: 16, 64>}]} {
    %c0 = arith.constant 0 : index
    %c0_0 = arith.constant 0 : index
    %0 = vector.load %arg1[%c0, %c0_0] : memref<48x64xbf16, #tpu.memory_space<vmem>>, vector<48x64xbf16>
    %c0_1 = arith.constant 0 : index
    %c0_2 = arith.constant 0 : index
    %1 = vector.load %arg2[%c0_1, %c0_2] : memref<16x48xbf16, #tpu.memory_space<vmem>>, vector<16x48xbf16>
    %cst = arith.constant dense<0.000000e+00> : vector<16x64xf32>
    %2 = tpu.matmul %1, %0, %cst {dimension_numbers = #tpu.dot_dimension_numbers<[1], [0], [0], [1], [0, 0, 1, 1], [], []>} : vector<16x48xbf16>, vector<48x64xbf16>, vector<16x64xf32> -> vector<16x64xf32>
    %c0_3 = arith.constant 0 : index
    %c0_4 = arith.constant 0 : index
    %3 = vector.load %arg3[%c0_3, %c0_4] : memref<16x1xf32, #tpu.memory_space<vmem>>, vector<16x1xf32>
    %4 = vector.broadcast %3 : vector<16x1xf32> to vector<16x64xf32>
    %5 = arith.addf %2, %4 : vector<16x64xf32>
    %c0_5 = arith.constant 0 : index
    %c0_6 = arith.constant 0 : index
    %6 = vector.load %arg4[%c0_5, %c0_6] : memref<16x64xbf16, #tpu.memory_space<vmem>>, vector<16x64xbf16>
    %7 = arith.extf %6 : vector<16x64xbf16> to vector<16x64xf32>
    %8 = arith.addf %5, %7 : vector<16x64xf32>
    %9 = arith.truncf %8 : vector<16x64xf32> to vector<16x64xbf16>
    %c0_7 = arith.constant 0 : index
    %c0_8 = arith.constant 0 : index
    %10 = vector.load %arg5[%c0_7, %c0_8] : memref<16x64xbf16, #tpu.memory_space<vmem>>, vector<16x64xbf16>
    tpu.vector_store %arg5[%c0_7, %c0_8], %9 {strides = array<i32>} : memref<16x64xbf16, #tpu.memory_space<vmem>>, vector<16x64xbf16>,
    return
  }
  func.func @transform_0(%arg0: i32) -> (i32, i32) {
    %c0_i32 = arith.constant 0 : i32
    %c0_i32_0 = arith.constant 0 : i32
    return %c0_i32, %arg0 : i32, i32
  }
  func.func @transform_1(%arg0: i32) -> (i32, i32) {
    %c0_i32 = arith.constant 0 : i32
    %c0_i32_0 = arith.constant 0 : i32
    %c0_i32_1 = arith.constant 0 : i32
    return %c0_i32, %c0_i32_0 : i32, i32
  }
  func.func @transform_2(%arg0: i32) -> (i32, i32) {
    %c0_i32 = arith.constant 0 : i32
    %c0_i32_0 = arith.constant 0 : i32
    %c0_i32_1 = arith.constant 0 : i32
    return %c0_i32, %c0_i32_0 : i32, i32
  }
  func.func @transform_3(%arg0: i32) -> (i32, i32) {
    %c0_i32 = arith.constant 0 : i32
    %c0_i32_0 = arith.constant 0 : i32
    return %c0_i32, %arg0 : i32, i32
  }
  func.func @transform_4(%arg0: i32) -> (i32, i32) {
    %c0_i32 = arith.constant 0 : i32
    %c0_i32_0 = arith.constant 0 : i32
    return %c0_i32, %arg0 : i32, i32
  }
}

module attributes {stable_mosaic.version = 11 : i64} {
  func.func @_max_k_kernel(%arg0: i32, %arg1: memref<16x32xbf16, #tpu.memory_space<vmem>>, %arg2: memref<16x32xbf16, #tpu.memory_space<vmem>>, %arg3: memref<16x32xbf16, #tpu.memory_space<vmem>>) attributes {dimension_semantics = [#tpu.dimension_semantics<parallel>], iteration_bounds = array<i64: 1>, scalar_prefetch = 0 : i64, scratch_operands = 0 : i64, tpu.core_type = #tpu.core_type<tc>, window_params = [{transform_indices = @transform_0, window_bounds = array<i64: 16, 32>}, {transform_indices = @transform_1, window_bounds = array<i64: 16, 32>}, {transform_indices = @transform_2, window_bounds = array<i64: 16, 32>}]} {
    %c0 = arith.constant 0 : index
    %c0_0 = arith.constant 0 : index
    %0 = vector.load %arg1[%c0, %c0_0] : memref<16x32xbf16, #tpu.memory_space<vmem>>, vector<16x32xbf16>
    %c0_1 = arith.constant 0 : index
    %c0_2 = arith.constant 0 : index
    %1 = vector.load %arg2[%c0_1, %c0_2] : memref<16x32xbf16, #tpu.memory_space<vmem>>, vector<16x32xbf16>
    %2 = arith.maximumf %0, %1 : vector<16x32xbf16>
    %c0_3 = arith.constant 0 : index
    %c0_4 = arith.constant 0 : index
    %3 = vector.load %arg3[%c0_3, %c0_4] : memref<16x32xbf16, #tpu.memory_space<vmem>>, vector<16x32xbf16>
    tpu.vector_store %arg3[%c0_3, %c0_4], %2 {strides = array<i32>} : memref<16x32xbf16, #tpu.memory_space<vmem>>, vector<16x32xbf16>,
    return
  }
  func.func @transform_0(%arg0: i32) -> (i32, i32) {
    %c0_i32 = arith.constant 0 : i32
    %c0_i32_0 = arith.constant 0 : i32
    return %c0_i32, %arg0 : i32, i32
  }
  func.func @transform_1(%arg0: i32) -> (i32, i32) {
    %c0_i32 = arith.constant 0 : i32
    %c0_i32_0 = arith.constant 0 : i32
    return %c0_i32, %arg0 : i32, i32
  }
  func.func @transform_2(%arg0: i32) -> (i32, i32) {
    %c0_i32 = arith.constant 0 : i32
    %c0_i32_0 = arith.constant 0 : i32
    return %c0_i32, %arg0 : i32, i32
  }
}

module attributes {stable_mosaic.version = 11 : i64} {
  func.func @kernel(%arg0: i32, %arg1: memref<48x32xbf16, #tpu.memory_space<vmem>>, %arg2: memref<16x48xbf16, #tpu.memory_space<vmem>>, %arg3: memref<16x1xf32, #tpu.memory_space<vmem>>, %arg4: memref<48x1xf32, #tpu.memory_space<vmem>>, %arg5: memref<48x1xf32, #tpu.memory_space<vmem>>, %arg6: memref<16x32xbf16, #tpu.memory_space<vmem>>) attributes {dimension_semantics = [#tpu.dimension_semantics<parallel>], iteration_bounds = array<i64: 1>, scalar_prefetch = 0 : i64, scratch_operands = 0 : i64, tpu.core_type = #tpu.core_type<tc>, window_params = [{transform_indices = @transform_0, window_bounds = array<i64: 48, 32>}, {pipeline_mode = #tpu.pipeline_mode<synchronous>, transform_indices = @transform_1, window_bounds = array<i64: 16, 48>}, {pipeline_mode = #tpu.pipeline_mode<synchronous>, transform_indices = @transform_2, window_bounds = array<i64: 16, 1>}, {pipeline_mode = #tpu.pipeline_mode<synchronous>, transform_indices = @transform_3, window_bounds = array<i64: 48, 1>}, {pipeline_mode = #tpu.pipeline_mode<synchronous>, transform_indices = @transform_4, window_bounds = array<i64: 48, 1>}, {transform_indices = @transform_5, window_bounds = array<i64: 16, 32>}]} {
    %c0 = arith.constant 0 : index
    %c0_0 = arith.constant 0 : index
    %0 = vector.load %arg1[%c0, %c0_0] : memref<48x32xbf16, #tpu.memory_space<vmem>>, vector<48x32xbf16>
    %1 = arith.extf %0 : vector<48x32xbf16> to vector<48x32xf32>
    %c0_1 = arith.constant 0 : index
    %c0_2 = arith.constant 0 : index
    %2 = vector.load %arg4[%c0_1, %c0_2] : memref<48x1xf32, #tpu.memory_space<vmem>>, vector<48x1xf32>
    %3 = vector.broadcast %2 : vector<48x1xf32> to vector<48x32xf32>
    %4 = arith.mulf %1, %3 : vector<48x32xf32>
    %c0_3 = arith.constant 0 : index
    %c0_4 = arith.constant 0 : index
    %5 = vector.load %arg5[%c0_3, %c0_4] : memref<48x1xf32, #tpu.memory_space<vmem>>, vector<48x1xf32>
    %6 = vector.broadcast %5 : vector<48x1xf32> to vector<48x32xf32>
    %7 = arith.addf %4, %6 : vector<48x32xf32>
    %cst = arith.constant 0.000000e+00 : f32
    %8 = vector.broadcast %cst : f32 to vector<48x32xf32>
    %9 = arith.maximumf %7, %8 : vector<48x32xf32>
    %10 = arith.truncf %9 : vector<48x32xf32> to vector<48x32xbf16>
    %c0_5 = arith.constant 0 : index
    %c0_6 = arith.constant 0 : index
    %11 = vector.load %arg2[%c0_5, %c0_6] : memref<16x48xbf16, #tpu.memory_space<vmem>>, vector<16x48xbf16>
    %cst_7 = arith.constant dense<0.000000e+00> : vector<16x32xf32>
    %12 = tpu.matmul %11, %10, %cst_7 {dimension_numbers = #tpu.dot_dimension_numbers<[1], [0], [0], [1], [0, 0, 1, 1], [], []>} : vector<16x48xbf16>, vector<48x32xbf16>, vector<16x32xf32> -> vector<16x32xf32>
    %c0_8 = arith.constant 0 : index
    %c0_9 = arith.constant 0 : index
    %13 = vector.load %arg3[%c0_8, %c0_9] : memref<16x1xf32, #tpu.memory_space<vmem>>, vector<16x1xf32>
    %14 = vector.broadcast %13 : vector<16x1xf32> to vector<16x32xf32>
    %15 = arith.addf %12, %14 : vector<16x32xf32>
    %cst_10 = arith.constant 0.000000e+00 : f32
    %16 = vector.broadcast %cst_10 : f32 to vector<16x32xf32>
    %17 = arith.maximumf %15, %16 : vector<16x32xf32>
    %18 = arith.truncf %17 : vector<16x32xf32> to vector<16x32xbf16>
    %c0_11 = arith.constant 0 : index
    %c0_12 = arith.constant 0 : index
    %19 = vector.load %arg6[%c0_11, %c0_12] : memref<16x32xbf16, #tpu.memory_space<vmem>>, vector<16x32xbf16>
    tpu.vector_store %arg6[%c0_11, %c0_12], %18 {strides = array<i32>} : memref<16x32xbf16, #tpu.memory_space<vmem>>, vector<16x32xbf16>,
    return
  }
  func.func @transform_0(%arg0: i32) -> (i32, i32) {
    %c0_i32 = arith.constant 0 : i32
    %c0_i32_0 = arith.constant 0 : i32
    return %c0_i32, %arg0 : i32, i32
  }
  func.func @transform_1(%arg0: i32) -> (i32, i32) {
    %c0_i32 = arith.constant 0 : i32
    %c0_i32_0 = arith.constant 0 : i32
    %c0_i32_1 = arith.constant 0 : i32
    return %c0_i32, %c0_i32_0 : i32, i32
  }
  func.func @transform_2(%arg0: i32) -> (i32, i32) {
    %c0_i32 = arith.constant 0 : i32
    %c0_i32_0 = arith.constant 0 : i32
    %c0_i32_1 = arith.constant 0 : i32
    return %c0_i32, %c0_i32_0 : i32, i32
  }
  func.func @transform_3(%arg0: i32) -> (i32, i32) {
    %c0_i32 = arith.constant 0 : i32
    %c0_i32_0 = arith.constant 0 : i32
    %c0_i32_1 = arith.constant 0 : i32
    return %c0_i32, %c0_i32_0 : i32, i32
  }
  func.func @transform_4(%arg0: i32) -> (i32, i32) {
    %c0_i32 = arith.constant 0 : i32
    %c0_i32_0 = arith.constant 0 : i32
    %c0_i32_1 = arith.constant 0 : i32
    return %c0_i32, %c0_i32_0 : i32, i32
  }
  func.func @transform_5(%arg0: i32) -> (i32, i32) {
    %c0_i32 = arith.constant 0 : i32
    %c0_i32_0 = arith.constant 0 : i32
    return %c0_i32, %arg0 : i32, i32
  }
}

module attributes {stable_mosaic.version = 11 : i64} {
  func.func @_scale_shift_relu_kernel(%arg0: i32, %arg1: memref<16x32xbf16, #tpu.memory_space<vmem>>, %arg2: memref<16x1xf32, #tpu.memory_space<vmem>>, %arg3: memref<16x1xf32, #tpu.memory_space<vmem>>, %arg4: memref<16x32xf32, #tpu.memory_space<vmem>>) attributes {dimension_semantics = [#tpu.dimension_semantics<parallel>], iteration_bounds = array<i64: 1>, scalar_prefetch = 0 : i64, scratch_operands = 0 : i64, tpu.core_type = #tpu.core_type<tc>, window_params = [{transform_indices = @transform_0, window_bounds = array<i64: 16, 32>}, {pipeline_mode = #tpu.pipeline_mode<synchronous>, transform_indices = @transform_1, window_bounds = array<i64: 16, 1>}, {pipeline_mode = #tpu.pipeline_mode<synchronous>, transform_indices = @transform_2, window_bounds = array<i64: 16, 1>}, {transform_indices = @transform_3, window_bounds = array<i64: 16, 32>}]} {
    %c0 = arith.constant 0 : index
    %c0_0 = arith.constant 0 : index
    %0 = vector.load %arg1[%c0, %c0_0] : memref<16x32xbf16, #tpu.memory_space<vmem>>, vector<16x32xbf16>
    %1 = arith.extf %0 : vector<16x32xbf16> to vector<16x32xf32>
    %c0_1 = arith.constant 0 : index
    %c0_2 = arith.constant 0 : index
    %2 = vector.load %arg2[%c0_1, %c0_2] : memref<16x1xf32, #tpu.memory_space<vmem>>, vector<16x1xf32>
    %3 = vector.broadcast %2 : vector<16x1xf32> to vector<16x32xf32>
    %4 = arith.mulf %1, %3 : vector<16x32xf32>
    %c0_3 = arith.constant 0 : index
    %c0_4 = arith.constant 0 : index
    %5 = vector.load %arg3[%c0_3, %c0_4] : memref<16x1xf32, #tpu.memory_space<vmem>>, vector<16x1xf32>
    %6 = vector.broadcast %5 : vector<16x1xf32> to vector<16x32xf32>
    %7 = arith.addf %4, %6 : vector<16x32xf32>
    %cst = arith.constant 0.000000e+00 : f32
    %8 = vector.broadcast %cst : f32 to vector<16x32xf32>
    %9 = arith.maximumf %7, %8 : vector<16x32xf32>
    %c0_5 = arith.constant 0 : index
    %c0_6 = arith.constant 0 : index
    %10 = vector.load %arg4[%c0_5, %c0_6] : memref<16x32xf32, #tpu.memory_space<vmem>>, vector<16x32xf32>
    tpu.vector_store %arg4[%c0_5, %c0_6], %9 {strides = array<i32>} : memref<16x32xf32, #tpu.memory_space<vmem>>, vector<16x32xf32>,
    return
  }
  func.func @transform_0(%arg0: i32) -> (i32, i32) {
    %c0_i32 = arith.constant 0 : i32
    %c0_i32_0 = arith.constant 0 : i32
    return %c0_i32, %arg0 : i32, i32
  }
  func.func @transform_1(%arg0: i32) -> (i32, i32) {
    %c0_i32 = arith.constant 0 : i32
    %c0_i32_0 = arith.constant 0 : i32
    %c0_i32_1 = arith.constant 0 : i32
    return %c0_i32, %c0_i32_0 : i32, i32
  }
  func.func @transform_2(%arg0: i32) -> (i32, i32) {
    %c0_i32 = arith.constant 0 : i32
    %c0_i32_0 = arith.constant 0 : i32
    %c0_i32_1 = arith.constant 0 : i32
    return %c0_i32, %c0_i32_0 : i32, i32
  }
  func.func @transform_3(%arg0: i32) -> (i32, i32) {
    %c0_i32 = arith.constant 0 : i32
    %c0_i32_0 = arith.constant 0 : i32
    return %c0_i32, %arg0 : i32, i32
  }
}

module attributes {stable_mosaic.version = 11 : i64} {
  func.func @kernel(%arg0: i32, %arg1: memref<48x32xbf16, #tpu.memory_space<vmem>>, %arg2: memref<16x48xbf16, #tpu.memory_space<vmem>>, %arg3: memref<16x1xf32, #tpu.memory_space<vmem>>, %arg4: memref<16x32xbf16, #tpu.memory_space<vmem>>, %arg5: memref<16x32xbf16, #tpu.memory_space<vmem>>) attributes {dimension_semantics = [#tpu.dimension_semantics<parallel>], iteration_bounds = array<i64: 1>, scalar_prefetch = 0 : i64, scratch_operands = 0 : i64, tpu.core_type = #tpu.core_type<tc>, window_params = [{transform_indices = @transform_0, window_bounds = array<i64: 48, 32>}, {pipeline_mode = #tpu.pipeline_mode<synchronous>, transform_indices = @transform_1, window_bounds = array<i64: 16, 48>}, {pipeline_mode = #tpu.pipeline_mode<synchronous>, transform_indices = @transform_2, window_bounds = array<i64: 16, 1>}, {transform_indices = @transform_3, window_bounds = array<i64: 16, 32>}, {transform_indices = @transform_4, window_bounds = array<i64: 16, 32>}]} {
    %c0 = arith.constant 0 : index
    %c0_0 = arith.constant 0 : index
    %0 = vector.load %arg1[%c0, %c0_0] : memref<48x32xbf16, #tpu.memory_space<vmem>>, vector<48x32xbf16>
    %c0_1 = arith.constant 0 : index
    %c0_2 = arith.constant 0 : index
    %1 = vector.load %arg2[%c0_1, %c0_2] : memref<16x48xbf16, #tpu.memory_space<vmem>>, vector<16x48xbf16>
    %cst = arith.constant dense<0.000000e+00> : vector<16x32xf32>
    %2 = tpu.matmul %1, %0, %cst {dimension_numbers = #tpu.dot_dimension_numbers<[1], [0], [0], [1], [0, 0, 1, 1], [], []>} : vector<16x48xbf16>, vector<48x32xbf16>, vector<16x32xf32> -> vector<16x32xf32>
    %c0_3 = arith.constant 0 : index
    %c0_4 = arith.constant 0 : index
    %3 = vector.load %arg3[%c0_3, %c0_4] : memref<16x1xf32, #tpu.memory_space<vmem>>, vector<16x1xf32>
    %4 = vector.broadcast %3 : vector<16x1xf32> to vector<16x32xf32>
    %5 = arith.addf %2, %4 : vector<16x32xf32>
    %c0_5 = arith.constant 0 : index
    %c0_6 = arith.constant 0 : index
    %6 = vector.load %arg4[%c0_5, %c0_6] : memref<16x32xbf16, #tpu.memory_space<vmem>>, vector<16x32xbf16>
    %7 = arith.extf %6 : vector<16x32xbf16> to vector<16x32xf32>
    %8 = arith.addf %5, %7 : vector<16x32xf32>
    %9 = arith.truncf %8 : vector<16x32xf32> to vector<16x32xbf16>
    %c0_7 = arith.constant 0 : index
    %c0_8 = arith.constant 0 : index
    %10 = vector.load %arg5[%c0_7, %c0_8] : memref<16x32xbf16, #tpu.memory_space<vmem>>, vector<16x32xbf16>
    tpu.vector_store %arg5[%c0_7, %c0_8], %9 {strides = array<i32>} : memref<16x32xbf16, #tpu.memory_space<vmem>>, vector<16x32xbf16>,
    return
  }
  func.func @transform_0(%arg0: i32) -> (i32, i32) {
    %c0_i32 = arith.constant 0 : i32
    %c0_i32_0 = arith.constant 0 : i32
    return %c0_i32, %arg0 : i32, i32
  }
  func.func @transform_1(%arg0: i32) -> (i32, i32) {
    %c0_i32 = arith.constant 0 : i32
    %c0_i32_0 = arith.constant 0 : i32
    %c0_i32_1 = arith.constant 0 : i32
    return %c0_i32, %c0_i32_0 : i32, i32
  }
  func.func @transform_2(%arg0: i32) -> (i32, i32) {
    %c0_i32 = arith.constant 0 : i32
    %c0_i32_0 = arith.constant 0 : i32
    %c0_i32_1 = arith.constant 0 : i32
    return %c0_i32, %c0_i32_0 : i32, i32
  }
  func.func @transform_3(%arg0: i32) -> (i32, i32) {
    %c0_i32 = arith.constant 0 : i32
    %c0_i32_0 = arith.constant 0 : i32
    return %c0_i32, %arg0 : i32, i32
  }
  func.func @transform_4(%arg0: i32) -> (i32, i32) {
    %c0_i32 = arith.constant 0 : i32
    %c0_i32_0 = arith.constant 0 : i32
    return %c0_i32, %arg0 : i32, i32
  }
}

</mosaic_0001>

<llo_original>
// kernel: _lambda_.13
$region0: #{_lambda_.13}
  #allocation0 [shape = 'u32[]', space=smem, size = 0x4, offset = 0x4, fixed_abs, tag = 'smem constant byte address 0x4 - core index']
  #allocation1 [shape = 'u32[144,128]{1,0:T(1,128)}', space=vmem, size = 0x12000, scoped, tag = 'internal scratch']
  %s0 = inlined_call_operand.vmem [shape: bf16[24,128], index: 0, kind: input, shape index: {}]
  %s1 = inlined_call_operand.vmem [shape: bf16[8,24], index: 1, kind: input, shape index: {}]
  %s2 = inlined_call_operand.vmem [shape: f32[8,1], index: 2, kind: input, shape index: {}]
  %s3 = inlined_call_operand.vmem [shape: bf16[8,128], index: 3, kind: output, shape index: {}]
  %s4 = sld [smem:[#allocation0]]
  $region22: #{_lambda_.13} parent=0
    _
  %s6 = ssub.s32 1, %s4
  %s7 = scalar_select 0, %s6, %s4
  // Predicated region
  $region2: #{_lambda_.13} parent=0 // pred_check
    _
  $region3: #{_lambda_.13} parent=0 // pred_check_branch
    %9 = sbr.rel (0) target = $region5
  $region4: #{_lambda_.13} parent=0 // pred_region
    _
  $region5: #{_lambda_.13} parent=0 // pred_fallthru
    _
  // Predicated region
  $region6: #{_lambda_.13} parent=0 // pred_check
    _
  $region7: #{_lambda_.13} parent=0 // pred_check_branch
    %11 = sbr.rel (0) target = $region9
  $region8: #{_lambda_.13} parent=0 // pred_region
    _
  $region9: #{_lambda_.13} parent=0 // pred_fallthru
    _
  // Predicated region
  $region10: #{_lambda_.13} parent=0 // pred_check
    _
  $region11: #{_lambda_.13} parent=0 // pred_check_branch
    %13 = sbr.rel (0) target = $region13
  $region12: #{_lambda_.13} parent=0 // pred_region
    _
  $region13: #{_lambda_.13} parent=0 // pred_fallthru
    _
  %v15 = vld [vmem:[%s0] sm:$0xf]
  %v16 = vld [vmem:[%s0 + $0x4] sm:$0xf]
  %v17 = vld [vmem:[%s0 + $0x8] sm:$0xf]
  %v18 = vld [vmem:[%s1] sm:$0xf]
  %v19 = vld [vmem:[%s2] sm:$0xff]
  %21 = vset.pattern.permute.xlu0 0
  %22 = vperm.xlu0 %21, %v19
  %v23 = vpop.permute.xlu0 %22
  %v28 = vunpack.c.l.b16 %v15
  %v29 = vunpack.c.l.b16 %v16
  %v30 = vunpack.c.l.b16 %v17
  %v31 = vpack.c.b16 %v29, %v28
  %v32 = vpack.c.b16 %v30, %v30
  %vm34 = vcmask 195584
  %v36 = vsel %vm34, %v18, 0
  %vm38 = vcmask 1043456
  %v40 = vsel %vm38, %v32, 0
  %42 = vmatprep.subr.bf16.mxu0 0
  %43 = vmatpush1.bf16.msra.mxu0 0
  %44 = vmatprep.subr.bf16.mxu0 0
  %45 = vmatpush1.bf16.msra.mxu0 0
  %46 = vmatprep.subr.bf16.mxu0 0
  %47 = vmatpush1.bf16.msra.mxu0 0
  %48 = vmatprep.subr.bf16.mxu0 0
  %49 = vmatpush1.bf16.msra.mxu0 0
  %50 = vmatprep.subr.bf16.mxu0 0
  %51 = vmatpush1.bf16.msra.mxu0 0
  %52 = vmatprep.subr.bf16.mxu0 0
  %53 = vmatpush1.bf16.msra.mxu0 0
  %54 = vmatprep.subr.bf16.mxu0 0
  %55 = vmatpush1.bf16.msra.mxu0 %v40
  %56 = vmatprep.subr.bf16.mxu0 0
  %57 = vmatpush1.bf16.msra.mxu0 %v31
  %58 = vmatprep.subr.bf16.mxu0 0
  %59 = vmatpush2.bf16.msra.mxu0 0
  %60 = vmatprep.subr.bf16.mxu0 0
  %61 = vmatpush2.bf16.msra.mxu0 0
  %62 = vmatprep.subr.bf16.mxu0 0
  %63 = vmatpush2.bf16.msra.mxu0 0
  %64 = vmatprep.subr.bf16.mxu0 0
  %65 = vmatpush2.bf16.msra.mxu0 0
  %66 = vmatprep.subr.bf16.mxu0 0
  %67 = vmatpush2.bf16.msra.mxu0 0
  %68 = vmatprep.subr.bf16.mxu0 0
  %69 = vmatpush2.bf16.msra.mxu0 0
  %70 = vmatprep.subr.bf16.mxu0 0
  %71 = vmatpush2.bf16.msra.mxu0 0
  %72 = vmatprep.subr.bf16.mxu0 0
  %73 = vmatpush2.bf16.msra.mxu0 0
  %74 = vmatprep.mubr.bf16.mxu0 0
  %75 = vmatmul.mubr.bf16.gmra.mxu0 %v36
  %v76 = vpop.f32.mrf.mxu0
  %v77 = vadd.f32 %v23, %v76
  %v78 = vpop.f32.mrf.mxu0
  %v79 = vpop.f32.mrf.mxu0
  %v80 = vpop.f32.mrf.mxu0
  %81 = vdwg.mxu0
  %v82 = vmax.f32 %v77, 0.0
  %v83 = vpack.c.bf16 %v82, %v82
  %84 = vst [vmem:[%s3] sm:$0xf] %v83
  // Predicated region
  $region14: #{_lambda_.13} parent=0 // pred_check
    _
  $region15: #{_lambda_.13} parent=0 // pred_check_branch
    %86 = sbr.rel (0) target = $region17
  $region16: #{_lambda_.13} parent=0 // pred_region
    _
  $region17: #{_lambda_.13} parent=0 // pred_fallthru
    _
  // Predicated region
  $region18: #{_lambda_.13} parent=0 // pred_check
    _
  $region19: #{_lambda_.13} parent=0 // pred_check_branch
    %88 = sbr.rel (0) target = $region21
  $region20: #{_lambda_.13} parent=0 // pred_region
    _
  $region21: #{_lambda_.13} parent=0 // pred_fallthru
    _

// kernel: _lambda_.12
$region0: #{_lambda_.12}
  #allocation0 [shape = 'u32[]', space=smem, size = 0x4, offset = 0x4, fixed_abs, tag = 'smem constant byte address 0x4 - core index']
  #allocation1 [shape = 'u32[144,128]{1,0:T(1,128)}', space=vmem, size = 0x12000, scoped, tag = 'internal scratch']
  %s0 = inlined_call_operand.vmem [shape: bf16[12,128], index: 0, kind: input, shape index: {}]
  %s1 = inlined_call_operand.vmem [shape: bf16[8,12], index: 1, kind: input, shape index: {}]
  %s2 = inlined_call_operand.vmem [shape: f32[8,1], index: 2, kind: input, shape index: {}]
  %s3 = inlined_call_operand.vmem [shape: bf16[8,128], index: 3, kind: output, shape index: {}]
  %s4 = sld [smem:[#allocation0]]
  $region22: #{_lambda_.12} parent=0
    _
  %s6 = ssub.s32 1, %s4
  %s7 = scalar_select 0, %s6, %s4
  // Predicated region
  $region2: #{_lambda_.12} parent=0 // pred_check
    _
  $region3: #{_lambda_.12} parent=0 // pred_check_branch
    %9 = sbr.rel (0) target = $region5
  $region4: #{_lambda_.12} parent=0 // pred_region
    _
  $region5: #{_lambda_.12} parent=0 // pred_fallthru
    _
  // Predicated region
  $region6: #{_lambda_.12} parent=0 // pred_check
    _
  $region7: #{_lambda_.12} parent=0 // pred_check_branch
    %11 = sbr.rel (0) target = $region9
  $region8: #{_lambda_.12} parent=0 // pred_region
    _
  $region9: #{_lambda_.12} parent=0 // pred_fallthru
    _
  // Predicated region
  $region10: #{_lambda_.12} parent=0 // pred_check
    _
  $region11: #{_lambda_.12} parent=0 // pred_check_branch
    %13 = sbr.rel (0) target = $region13
  $region12: #{_lambda_.12} parent=0 // pred_region
    _
  $region13: #{_lambda_.12} parent=0 // pred_fallthru
    _
  %v15 = vld [vmem:[%s0] sm:$0xf]
  %v16 = vld [vmem:[%s0 + $0x4] sm:$0x3]
  %v17 = vld [vmem:[%s1] sm:$0xf]
  %v18 = vld [vmem:[%s2] sm:$0xff]
  %20 = vset.pattern.permute.xlu0 0
  %21 = vperm.xlu0 %20, %v18
  %v22 = vpop.permute.xlu0 %21
  %v26 = vunpack.c.l.b16 %v15
  %v27 = vunpack.c.l.b16 %v16
  %v28 = vpack.c.b16 %v27, %v26
  %vm29 = vcmask 97280
  %v31 = vsel %vm29, %v17, 0
  %vm33 = vcmask 1045504
  %v35 = vsel %vm33, %v28, 0
  %37 = vmatprep.subr.bf16.mxu0 0
  %38 = vmatpush1.bf16.msra.mxu0 0
  %39 = vmatprep.subr.bf16.mxu0 0
  %40 = vmatpush1.bf16.msra.mxu0 0
  %41 = vmatprep.subr.bf16.mxu0 0
  %42 = vmatpush1.bf16.msra.mxu0 0
  %43 = vmatprep.subr.bf16.mxu0 0
  %44 = vmatpush1.bf16.msra.mxu0 0
  %45 = vmatprep.subr.bf16.mxu0 0
  %46 = vmatpush1.bf16.msra.mxu0 0
  %47 = vmatprep.subr.bf16.mxu0 0
  %48 = vmatpush1.bf16.msra.mxu0 0
  %49 = vmatprep.subr.bf16.mxu0 0
  %50 = vmatpush1.bf16.msra.mxu0 0
  %51 = vmatprep.subr.bf16.mxu0 0
  %52 = vmatpush1.bf16.msra.mxu0 %v35
  %53 = vmatprep.subr.bf16.mxu0 0
  %54 = vmatpush2.bf16.msra.mxu0 0
  %55 = vmatprep.subr.bf16.mxu0 0
  %56 = vmatpush2.bf16.msra.mxu0 0
  %57 = vmatprep.subr.bf16.mxu0 0
  %58 = vmatpush2.bf16.msra.mxu0 0
  %59 = vmatprep.subr.bf16.mxu0 0
  %60 = vmatpush2.bf16.msra.mxu0 0
  %61 = vmatprep.subr.bf16.mxu0 0
  %62 = vmatpush2.bf16.msra.mxu0 0
  %63 = vmatprep.subr.bf16.mxu0 0
  %64 = vmatpush2.bf16.msra.mxu0 0
  %65 = vmatprep.subr.bf16.mxu0 0
  %66 = vmatpush2.bf16.msra.mxu0 0
  %67 = vmatprep.subr.bf16.mxu0 0
  %68 = vmatpush2.bf16.msra.mxu0 0
  %69 = vmatprep.mubr.bf16.mxu0 0
  %70 = vmatmul.mubr.bf16.gmra.mxu0 %v31
  %v71 = vpop.f32.mrf.mxu0
  %v72 = vadd.f32 %v22, %v71
  %v73 = vpop.f32.mrf.mxu0
  %v74 = vpop.f32.mrf.mxu0
  %v75 = vpop.f32.mrf.mxu0
  %76 = vdwg.mxu0
  %v77 = vmax.f32 %v72, 0.0
  %v78 = vpack.c.bf16 %v77, %v77
  %79 = vst [vmem:[%s3] sm:$0xf] %v78
  // Predicated region
  $region14: #{_lambda_.12} parent=0 // pred_check
    _
  $region15: #{_lambda_.12} parent=0 // pred_check_branch
    %81 = sbr.rel (0) target = $region17
  $region16: #{_lambda_.12} parent=0 // pred_region
    _
  $region17: #{_lambda_.12} parent=0 // pred_fallthru
    _
  // Predicated region
  $region18: #{_lambda_.12} parent=0 // pred_check
    _
  $region19: #{_lambda_.12} parent=0 // pred_check_branch
    %83 = sbr.rel (0) target = $region21
  $region20: #{_lambda_.12} parent=0 // pred_region
    _
  $region21: #{_lambda_.12} parent=0 // pred_fallthru
    _

// kernel: _lambda_.14
$region0: #{_lambda_.14}
  #allocation0 [shape = 'u32[]', space=smem, size = 0x4, offset = 0x4, fixed_abs, tag = 'smem constant byte address 0x4 - core index']
  #allocation1 [shape = 'u32[144,128]{1,0:T(1,128)}', space=vmem, size = 0x12000, scoped, tag = 'internal scratch']
  %s0 = inlined_call_operand.vmem [shape: bf16[24,128], index: 0, kind: input, shape index: {}]
  %s1 = inlined_call_operand.vmem [shape: bf16[8,24], index: 1, kind: input, shape index: {}]
  %s2 = inlined_call_operand.vmem [shape: f32[8,1], index: 2, kind: input, shape index: {}]
  %s3 = inlined_call_operand.vmem [shape: bf16[8,128], index: 3, kind: input, shape index: {}]
  %s4 = inlined_call_operand.vmem [shape: bf16[8,128], index: 4, kind: output, shape index: {}]
  %s5 = sld [smem:[#allocation0]]
  $region26: #{_lambda_.14} parent=0
    _
  %s7 = ssub.s32 1, %s5
  %s8 = scalar_select 0, %s7, %s5
  // Predicated region
  $region2: #{_lambda_.14} parent=0 // pred_check
    _
  $region3: #{_lambda_.14} parent=0 // pred_check_branch
    %10 = sbr.rel (0) target = $region5
  $region4: #{_lambda_.14} parent=0 // pred_region
    _
  $region5: #{_lambda_.14} parent=0 // pred_fallthru
    _
  // Predicated region
  $region6: #{_lambda_.14} parent=0 // pred_check
    _
  $region7: #{_lambda_.14} parent=0 // pred_check_branch
    %12 = sbr.rel (0) target = $region9
  $region8: #{_lambda_.14} parent=0 // pred_region
    _
  $region9: #{_lambda_.14} parent=0 // pred_fallthru
    _
  // Predicated region
  $region10: #{_lambda_.14} parent=0 // pred_check
    _
  $region11: #{_lambda_.14} parent=0 // pred_check_branch
    %14 = sbr.rel (0) target = $region13
  $region12: #{_lambda_.14} parent=0 // pred_region
    _
  $region13: #{_lambda_.14} parent=0 // pred_fallthru
    _
  // Predicated region
  $region14: #{_lambda_.14} parent=0 // pred_check
    _
  $region15: #{_lambda_.14} parent=0 // pred_check_branch
    %16 = sbr.rel (0) target = $region17
  $region16: #{_lambda_.14} parent=0 // pred_region
    _
  $region17: #{_lambda_.14} parent=0 // pred_fallthru
    _
  %v18 = vld [vmem:[%s0] sm:$0xf]
  %v19 = vld [vmem:[%s0 + $0x4] sm:$0xf]
  %v20 = vld [vmem:[%s0 + $0x8] sm:$0xf]
  %v21 = vld [vmem:[%s1] sm:$0xf]
  %v22 = vld [vmem:[%s2] sm:$0xff]
  %24 = vset.pattern.permute.xlu0 0
  %25 = vperm.xlu0 %24, %v22
  %v26 = vpop.permute.xlu0 %25
  %v31 = vunpack.c.l.b16 %v18
  %v32 = vunpack.c.l.b16 %v19
  %v33 = vunpack.c.l.b16 %v20
  %v34 = vpack.c.b16 %v32, %v31
  %v35 = vpack.c.b16 %v33, %v33
  %vm37 = vcmask 195584
  %v39 = vsel %vm37, %v21, 0
  %vm41 = vcmask 1043456
  %v43 = vsel %vm41, %v35, 0
  %45 = vmatprep.subr.bf16.mxu0 0
  %46 = vmatpush1.bf16.msra.mxu0 0
  %47 = vmatprep.subr.bf16.mxu0 0
  %48 = vmatpush1.bf16.msra.mxu0 0
  %49 = vmatprep.subr.bf16.mxu0 0
  %50 = vmatpush1.bf16.msra.mxu0 0
  %51 = vmatprep.subr.bf16.mxu0 0
  %52 = vmatpush1.bf16.msra.mxu0 0
  %53 = vmatprep.subr.bf16.mxu0 0
  %54 = vmatpush1.bf16.msra.mxu0 0
  %55 = vmatprep.subr.bf16.mxu0 0
  %56 = vmatpush1.bf16.msra.mxu0 0
  %57 = vmatprep.subr.bf16.mxu0 0
  %58 = vmatpush1.bf16.msra.mxu0 %v43
  %59 = vmatprep.subr.bf16.mxu0 0
  %60 = vmatpush1.bf16.msra.mxu0 %v34
  %61 = vmatprep.subr.bf16.mxu0 0
  %62 = vmatpush2.bf16.msra.mxu0 0
  %63 = vmatprep.subr.bf16.mxu0 0
  %64 = vmatpush2.bf16.msra.mxu0 0
  %65 = vmatprep.subr.bf16.mxu0 0
  %66 = vmatpush2.bf16.msra.mxu0 0
  %67 = vmatprep.subr.bf16.mxu0 0
  %68 = vmatpush2.bf16.msra.mxu0 0
  %69 = vmatprep.subr.bf16.mxu0 0
  %70 = vmatpush2.bf16.msra.mxu0 0
  %71 = vmatprep.subr.bf16.mxu0 0
  %72 = vmatpush2.bf16.msra.mxu0 0
  %73 = vmatprep.subr.bf16.mxu0 0
  %74 = vmatpush2.bf16.msra.mxu0 0
  %75 = vmatprep.subr.bf16.mxu0 0
  %76 = vmatpush2.bf16.msra.mxu0 0
  %77 = vmatprep.mubr.bf16.mxu0 0
  %78 = vmatmul.mubr.bf16.gmra.mxu0 %v39
  %v79 = vpop.f32.mrf.mxu0
  %v80 = vadd.f32 %v26, %v79
  %v81 = vpop.f32.mrf.mxu0
  %v82 = vpop.f32.mrf.mxu0
  %v83 = vpop.f32.mrf.mxu0
  %84 = vdwg.mxu0
  %v85 = vld [vmem:[%s3] sm:$0xf]
  %v86 = vunpack.c.l.bf16 %v85
  %v87 = vadd.f32 %v80, %v86
  %v88 = vpack.c.bf16 %v87, %v87
  %89 = vst [vmem:[%s4] sm:$0xf] %v88
  // Predicated region
  $region18: #{_lambda_.14} parent=0 // pred_check
    _
  $region19: #{_lambda_.14} parent=0 // pred_check_branch
    %91 = sbr.rel (0) target = $region21
  $region20: #{_lambda_.14} parent=0 // pred_region
    _
  $region21: #{_lambda_.14} parent=0 // pred_fallthru
    _
  // Predicated region
  $region22: #{_lambda_.14} parent=0 // pred_check
    _
  $region23: #{_lambda_.14} parent=0 // pred_check_branch
    %93 = sbr.rel (0) target = $region25
  $region24: #{_lambda_.14} parent=0 // pred_region
    _
  $region25: #{_lambda_.14} parent=0 // pred_fallthru
    _

// kernel: tile.33
$region0: #{tile.33}
  #allocation0 [shape = 's32[1]{0}', space=sflag, size = 0x4, scoped, tag = 'scoped memory for tile.33']
  %s0 = inlined_call_operand.vmem [shape: f32[8], index: 0, kind: input, shape index: {}]
  %s1 = inlined_call_operand.vmem [shape: f32[3,8], index: 1, kind: output, shape index: {}]
  // Predicated region
  $region2: #{tile.33} parent=0 // pred_check
    _
  $region3: #{tile.33} parent=0 // pred_check_branch
    %3 = sbr.rel (0) target = $region5
  $region4: #{tile.33} parent=0 // pred_region
    _
  $region5: #{tile.33} parent=0 // pred_fallthru
    _
  %v4 = vld [vmem:[%s0] ss:$0 sm:$0xff]
  %5 = vst [vmem:[%s1] sm:$0xf] %v4

// kernel: tile.0
$region0: #{tile.0}
  %s0 = inlined_call_operand.vmem [shape: f32[3,8], index: 0, kind: input, shape index: {}]
  %s1 = inlined_call_operand.vmem [shape: f32[24,1], index: 1, kind: output, shape index: {}]
  $region1: #{tile.0} parent=0
    #allocation0 [shape = 'u8[4096]{0}', space=vmem, size = 0x1000, scoped, tag = 'scoped mem for input reshape']
    %s3 = sshll.u32 1, 4
    %s4 = ssub.s32 %s3, 1
    %v5 = vld [vmem:[%s0] sm:%s4]
    %6 = vst [vmem:[#allocation0] sm:%s4] %v5
    %v7 = vld [vmem:[#allocation0] sm:$0x7]
    %vm8 = vcmask 7168
    %9 = vst.msk [vmem:[%s1] ss:$8 sm:$0x7] %vm8, %v7
    %v10 = vld [vmem:[#allocation0] sm:$0x7]
    %11 = vrot.lane.b32.xlu0 %v10, 127
    %v12 = vpop.permute.xlu0 %11
    %vm13 = vcmask 7168
    %s14 = scalar_lea.vmem %s1, 1
    %15 = vst.msk [vmem:[%s14] ss:$8 sm:$0x7] %vm13, %v12
    %v16 = vld [vmem:[#allocation0] sm:$0x7]
    %17 = vrot.lane.b32.xlu0 %v16, 126
    %v18 = vpop.permute.xlu0 %17
    %vm19 = vcmask 7168
    %s20 = scalar_lea.vmem %s1, 2
    %21 = vst.msk [vmem:[%s20] ss:$8 sm:$0x7] %vm19, %v18
    %v22 = vld [vmem:[#allocation0] sm:$0x7]
    %23 = vrot.lane.b32.xlu0 %v22, 125
    %v24 = vpop.permute.xlu0 %23
    %vm25 = vcmask 7168
    %s26 = scalar_lea.vmem %s1, 3
    %27 = vst.msk [vmem:[%s26] ss:$8 sm:$0x7] %vm25, %v24
    %v28 = vld [vmem:[#allocation0] sm:$0x7]
    %29 = vrot.lane.b32.xlu0 %v28, 124
    %v30 = vpop.permute.xlu0 %29
    %vm31 = vcmask 7168
    %s32 = scalar_lea.vmem %s1, 4
    %33 = vst.msk [vmem:[%s32] ss:$8 sm:$0x7] %vm31, %v30
    %v34 = vld [vmem:[#allocation0] sm:$0x7]
    %35 = vrot.lane.b32.xlu0 %v34, 123
    %v36 = vpop.permute.xlu0 %35
    %vm37 = vcmask 7168
    %s38 = scalar_lea.vmem %s1, 5
    %39 = vst.msk [vmem:[%s38] ss:$8 sm:$0x7] %vm37, %v36
    %v40 = vld [vmem:[#allocation0] sm:$0x7]
    %41 = vrot.lane.b32.xlu0 %v40, 122
    %v42 = vpop.permute.xlu0 %41
    %vm43 = vcmask 7168
    %s44 = scalar_lea.vmem %s1, 6
    %45 = vst.msk [vmem:[%s44] ss:$8 sm:$0x7] %vm43, %v42
    %v46 = vld [vmem:[#allocation0] sm:$0x7]
    %47 = vrot.lane.b32.xlu0 %v46, 121
    %v48 = vpop.permute.xlu0 %47
    %vm49 = vcmask 7168
    %s50 = scalar_lea.vmem %s1, 7
    %51 = vst.msk [vmem:[%s50] ss:$8 sm:$0x7] %vm49, %v48

// kernel: _lambda_.16
$region0: #{_lambda_.16}
  #allocation0 [shape = 'u32[]', space=smem, size = 0x4, offset = 0x4, fixed_abs, tag = 'smem constant byte address 0x4 - core index']
  #allocation1 [shape = 'u32[144,128]{1,0:T(1,128)}', space=vmem, size = 0x12000, scoped, tag = 'internal scratch']
  %s0 = inlined_call_operand.vmem [shape: bf16[8,64], index: 0, kind: input, shape index: {}]
  %s1 = inlined_call_operand.vmem [shape: bf16[8,64], index: 1, kind: input, shape index: {}]
  %s2 = inlined_call_operand.vmem [shape: bf16[8,64], index: 2, kind: output, shape index: {}]
  %s3 = sld [smem:[#allocation0]]
  $region18: #{_lambda_.16} parent=0
    _
  %s5 = ssub.s32 1, %s3
  %s6 = scalar_select 0, %s5, %s3
  // Predicated region
  $region2: #{_lambda_.16} parent=0 // pred_check
    _
  $region3: #{_lambda_.16} parent=0 // pred_check_branch
    %8 = sbr.rel (0) target = $region5
  $region4: #{_lambda_.16} parent=0 // pred_region
    _
  $region5: #{_lambda_.16} parent=0 // pred_fallthru
    _
  // Predicated region
  $region6: #{_lambda_.16} parent=0 // pred_check
    _
  $region7: #{_lambda_.16} parent=0 // pred_check_branch
    %10 = sbr.rel (0) target = $region9
  $region8: #{_lambda_.16} parent=0 // pred_region
    _
  $region9: #{_lambda_.16} parent=0 // pred_fallthru
    _
  %v11 = vld [vmem:[%s0] sm:$0xf]
  %v12 = vld [vmem:[%s1] sm:$0xf]
  %v13 = vmax.bf16 %v11, %v12
  %vm14 = vcmask 519168
  %15 = vst.msk [vmem:[%s2] sm:$0xf] %vm14, %v13
  // Predicated region
  $region10: #{_lambda_.16} parent=0 // pred_check
    _
  $region11: #{_lambda_.16} parent=0 // pred_check_branch
    %17 = sbr.rel (0) target = $region13
  $region12: #{_lambda_.16} parent=0 // pred_region
    _
  $region13: #{_lambda_.16} parent=0 // pred_fallthru
    _
  // Predicated region
  $region14: #{_lambda_.16} parent=0 // pred_check
    _
  $region15: #{_lambda_.16} parent=0 // pred_check_branch
    %19 = sbr.rel (0) target = $region17
  $region16: #{_lambda_.16} parent=0 // pred_region
    _
  $region17: #{_lambda_.16} parent=0 // pred_fallthru
    _

// kernel: _lambda_.15
$region0: #{_lambda_.15}
  #allocation0 [shape = 'u32[]', space=smem, size = 0x4, offset = 0x4, fixed_abs, tag = 'smem constant byte address 0x4 - core index']
  #allocation1 [shape = 'u32[144,128]{1,0:T(1,128)}', space=vmem, size = 0x12000, scoped, tag = 'internal scratch']
  %s0 = inlined_call_operand.vmem [shape: bf16[24,64], index: 0, kind: input, shape index: {}]
  %s1 = inlined_call_operand.vmem [shape: bf16[8,24], index: 1, kind: input, shape index: {}]
  %s2 = inlined_call_operand.vmem [shape: f32[8,1], index: 2, kind: input, shape index: {}]
  %s3 = inlined_call_operand.vmem [shape: f32[24,1], index: 3, kind: input, shape index: {}]
  %s4 = inlined_call_operand.vmem [shape: f32[24,1], index: 4, kind: input, shape index: {}]
  %s5 = inlined_call_operand.vmem [shape: bf16[8,64], index: 5, kind: output, shape index: {}]
  %s6 = sld [smem:[#allocation0]]
  $region30: #{_lambda_.15} parent=0
    _
  %s8 = ssub.s32 1, %s6
  %s9 = scalar_select 0, %s8, %s6
  // Predicated region
  $region2: #{_lambda_.15} parent=0 // pred_check
    _
  $region3: #{_lambda_.15} parent=0 // pred_check_branch
    %11 = sbr.rel (0) target = $region5
  $region4: #{_lambda_.15} parent=0 // pred_region
    _
  $region5: #{_lambda_.15} parent=0 // pred_fallthru
    _
  // Predicated region
  $region6: #{_lambda_.15} parent=0 // pred_check
    _
  $region7: #{_lambda_.15} parent=0 // pred_check_branch
    %13 = sbr.rel (0) target = $region9
  $region8: #{_lambda_.15} parent=0 // pred_region
    _
  $region9: #{_lambda_.15} parent=0 // pred_fallthru
    _
  // Predicated region
  $region10: #{_lambda_.15} parent=0 // pred_check
    _
  $region11: #{_lambda_.15} parent=0 // pred_check_branch
    %15 = sbr.rel (0) target = $region13
  $region12: #{_lambda_.15} parent=0 // pred_region
    _
  $region13: #{_lambda_.15} parent=0 // pred_fallthru
    _
  // Predicated region
  $region14: #{_lambda_.15} parent=0 // pred_check
    _
  $region15: #{_lambda_.15} parent=0 // pred_check_branch
    %17 = sbr.rel (0) target = $region17
  $region16: #{_lambda_.15} parent=0 // pred_region
    _
  $region17: #{_lambda_.15} parent=0 // pred_fallthru
    _
  // Predicated region
  $region18: #{_lambda_.15} parent=0 // pred_check
    _
  $region19: #{_lambda_.15} parent=0 // pred_check_branch
    %19 = sbr.rel (0) target = $region21
  $region20: #{_lambda_.15} parent=0 // pred_region
    _
  $region21: #{_lambda_.15} parent=0 // pred_fallthru
    _
  %v21 = vld [vmem:[%s0] sm:$0xf]
  %v22 = vld [vmem:[%s0 + $0x4] sm:$0xf]
  %v23 = vld [vmem:[%s0 + $0x8] sm:$0xf]
  %v24 = vunpack.c.l.bf16 %v21
  %v25 = vunpack.c.l.bf16 %v22
  %v26 = vunpack.c.l.bf16 %v23
  %v27 = vld [vmem:[%s3] sm:$0xff]
  %v28 = vld [vmem:[%s3 + $0x8] sm:$0xff]
  %v29 = vld [vmem:[%s3 + $0x10] sm:$0xff]
  %31 = vset.pattern.permute.xlu0 0
  %32 = vperm.xlu0 %31, %v27
  %v33 = vpop.permute.xlu0 %32
  %36 = vset.pattern.permute.xlu0 0
  %37 = vperm.xlu0 %36, %v28
  %v38 = vpop.permute.xlu0 %37
  %41 = vset.pattern.permute.xlu0 0
  %42 = vperm.xlu0 %41, %v29
  %v43 = vpop.permute.xlu0 %42
  %v45 = vmul.f32 %v24, %v33
  %v46 = vmul.f32 %v25, %v38
  %v47 = vmul.f32 %v26, %v43
  %v48 = vld [vmem:[%s4] sm:$0xff]
  %v49 = vld [vmem:[%s4 + $0x8] sm:$0xff]
  %v50 = vld [vmem:[%s4 + $0x10] sm:$0xff]
  %52 = vset.pattern.permute.xlu0 0
  %53 = vperm.xlu0 %52, %v48
  %v54 = vpop.permute.xlu0 %53
  %57 = vset.pattern.permute.xlu0 0
  %58 = vperm.xlu0 %57, %v49
  %v59 = vpop.permute.xlu0 %58
  %62 = vset.pattern.permute.xlu0 0
  %63 = vperm.xlu0 %62, %v50
  %v64 = vpop.permute.xlu0 %63
  %v66 = vadd.f32 %v45, %v54
  %v67 = vadd.f32 %v46, %v59
  %v68 = vadd.f32 %v47, %v64
  %v69 = vmax.f32 %v66, 0.0
  %v70 = vmax.f32 %v67, 0.0
  %v71 = vmax.f32 %v68, 0.0
  %v72 = vpack.c.bf16 %v70, %v69
  %v73 = vpack.c.bf16 %v71, %v71
  %v74 = vld [vmem:[%s1] sm:$0xf]
  %v75 = vld [vmem:[%s2] sm:$0xff]
  %77 = vset.pattern.permute.xlu0 0
  %78 = vperm.xlu0 %77, %v75
  %v79 = vpop.permute.xlu0 %78
  %vm81 = vcmask 195584
  %v83 = vsel %vm81, %v74, 0
  %vm85 = vcmask 1043456
  %v87 = vsel %vm85, %v73, 0
  %89 = vmatprep.subr.bf16.mxu0 0
  %90 = vmatpush1.bf16.msra.mxu0 0
  %91 = vmatprep.subr.bf16.mxu0 0
  %92 = vmatpush1.bf16.msra.mxu0 0
  %93 = vmatprep.subr.bf16.mxu0 0
  %94 = vmatpush1.bf16.msra.mxu0 0
  %95 = vmatprep.subr.bf16.mxu0 0
  %96 = vmatpush1.bf16.msra.mxu0 0
  %97 = vmatprep.subr.bf16.mxu0 0
  %98 = vmatpush1.bf16.msra.mxu0 0
  %99 = vmatprep.subr.bf16.mxu0 0
  %100 = vmatpush1.bf16.msra.mxu0 0
  %101 = vmatprep.subr.bf16.mxu0 0
  %102 = vmatpush1.bf16.msra.mxu0 %v87
  %103 = vmatprep.subr.bf16.mxu0 0
  %104 = vmatpush1.bf16.msra.mxu0 %v72
  %105 = vmatprep.subr.bf16.mxu0 0
  %106 = vmatpush2.bf16.msra.mxu0 0
  %107 = vmatprep.subr.bf16.mxu0 0
  %108 = vmatpush2.bf16.msra.mxu0 0
  %109 = vmatprep.subr.bf16.mxu0 0
  %110 = vmatpush2.bf16.msra.mxu0 0
  %111 = vmatprep.subr.bf16.mxu0 0
  %112 = vmatpush2.bf16.msra.mxu0 0
  %113 = vmatprep.subr.bf16.mxu0 0
  %114 = vmatpush2.bf16.msra.mxu0 0
  %115 = vmatprep.subr.bf16.mxu0 0
  %116 = vmatpush2.bf16.msra.mxu0 0
  %117 = vmatprep.subr.bf16.mxu0 0
  %118 = vmatpush2.bf16.msra.mxu0 0
  %119 = vmatprep.subr.bf16.mxu0 0
  %120 = vmatpush2.bf16.msra.mxu0 0
  %121 = vmatprep.mubr.bf16.mxu0 0
  %122 = vmatmul.mubr.bf16.gmra.mxu0 %v83
  %v123 = vpop.f32.mrf.mxu0
  %v124 = vadd.f32 %v79, %v123
  %v125 = vpop.f32.mrf.mxu0
  %v126 = vpop.f32.mrf.mxu0
  %v127 = vpop.f32.mrf.mxu0
  %128 = vdwg.mxu0
  %v129 = vmax.f32 %v124, 0.0
  %v130 = vpack.c.bf16 %v129, %v129
  %vm131 = vcmask 519168
  %132 = vst.msk [vmem:[%s5] sm:$0xf] %vm131, %v130
  // Predicated region
  $region22: #{_lambda_.15} parent=0 // pred_check
    _
  $region23: #{_lambda_.15} parent=0 // pred_check_branch
    %134 = sbr.rel (0) target = $region25
  $region24: #{_lambda_.15} parent=0 // pred_region
    _
  $region25: #{_lambda_.15} parent=0 // pred_fallthru
    _
  // Predicated region
  $region26: #{_lambda_.15} parent=0 // pred_check
    _
  $region27: #{_lambda_.15} parent=0 // pred_check_branch
    %136 = sbr.rel (0) target = $region29
  $region28: #{_lambda_.15} parent=0 // pred_region
    _
  $region29: #{_lambda_.15} parent=0 // pred_fallthru
    _

// kernel: _lambda_.17
$region0: #{_lambda_.17}
  #allocation0 [shape = 'u32[]', space=smem, size = 0x4, offset = 0x4, fixed_abs, tag = 'smem constant byte address 0x4 - core index']
  #allocation1 [shape = 'u32[144,128]{1,0:T(1,128)}', space=vmem, size = 0x12000, scoped, tag = 'internal scratch']
  %s0 = inlined_call_operand.vmem [shape: bf16[24,64], index: 0, kind: input, shape index: {}]
  %s1 = inlined_call_operand.vmem [shape: bf16[8,24], index: 1, kind: input, shape index: {}]
  %s2 = inlined_call_operand.vmem [shape: f32[8,1], index: 2, kind: input, shape index: {}]
  %s3 = inlined_call_operand.vmem [shape: bf16[8,64], index: 3, kind: input, shape index: {}]
  %s4 = inlined_call_operand.vmem [shape: bf16[8,64], index: 4, kind: output, shape index: {}]
  %s5 = sld [smem:[#allocation0]]
  $region26: #{_lambda_.17} parent=0
    _
  %s7 = ssub.s32 1, %s5
  %s8 = scalar_select 0, %s7, %s5
  // Predicated region
  $region2: #{_lambda_.17} parent=0 // pred_check
    _
  $region3: #{_lambda_.17} parent=0 // pred_check_branch
    %10 = sbr.rel (0) target = $region5
  $region4: #{_lambda_.17} parent=0 // pred_region
    _
  $region5: #{_lambda_.17} parent=0 // pred_fallthru
    _
  // Predicated region
  $region6: #{_lambda_.17} parent=0 // pred_check
    _
  $region7: #{_lambda_.17} parent=0 // pred_check_branch
    %12 = sbr.rel (0) target = $region9
  $region8: #{_lambda_.17} parent=0 // pred_region
    _
  $region9: #{_lambda_.17} parent=0 // pred_fallthru
    _
  // Predicated region
  $region10: #{_lambda_.17} parent=0 // pred_check
    _
  $region11: #{_lambda_.17} parent=0 // pred_check_branch
    %14 = sbr.rel (0) target = $region13
  $region12: #{_lambda_.17} parent=0 // pred_region
    _
  $region13: #{_lambda_.17} parent=0 // pred_fallthru
    _
  // Predicated region
  $region14: #{_lambda_.17} parent=0 // pred_check
    _
  $region15: #{_lambda_.17} parent=0 // pred_check_branch
    %16 = sbr.rel (0) target = $region17
  $region16: #{_lambda_.17} parent=0 // pred_region
    _
  $region17: #{_lambda_.17} parent=0 // pred_fallthru
    _
  %v18 = vld [vmem:[%s0] sm:$0xf]
  %v19 = vld [vmem:[%s0 + $0x4] sm:$0xf]
  %v20 = vld [vmem:[%s0 + $0x8] sm:$0xf]
  %v21 = vld [vmem:[%s1] sm:$0xf]
  %v22 = vld [vmem:[%s2] sm:$0xff]
  %24 = vset.pattern.permute.xlu0 0
  %25 = vperm.xlu0 %24, %v22
  %v26 = vpop.permute.xlu0 %25
  %v31 = vunpack.c.l.b16 %v18
  %v32 = vunpack.c.l.b16 %v19
  %v33 = vunpack.c.l.b16 %v20
  %v34 = vpack.c.b16 %v32, %v31
  %v35 = vpack.c.b16 %v33, %v33
  %vm37 = vcmask 195584
  %v39 = vsel %vm37, %v21, 0
  %vm41 = vcmask 1043456
  %v43 = vsel %vm41, %v35, 0
  %45 = vmatprep.subr.bf16.mxu0 0
  %46 = vmatpush1.bf16.msra.mxu0 0
  %47 = vmatprep.subr.bf16.mxu0 0
  %48 = vmatpush1.bf16.msra.mxu0 0
  %49 = vmatprep.subr.bf16.mxu0 0
  %50 = vmatpush1.bf16.msra.mxu0 0
  %51 = vmatprep.subr.bf16.mxu0 0
  %52 = vmatpush1.bf16.msra.mxu0 0
  %53 = vmatprep.subr.bf16.mxu0 0
  %54 = vmatpush1.bf16.msra.mxu0 0
  %55 = vmatprep.subr.bf16.mxu0 0
  %56 = vmatpush1.bf16.msra.mxu0 0
  %57 = vmatprep.subr.bf16.mxu0 0
  %58 = vmatpush1.bf16.msra.mxu0 %v43
  %59 = vmatprep.subr.bf16.mxu0 0
  %60 = vmatpush1.bf16.msra.mxu0 %v34
  %61 = vmatprep.subr.bf16.mxu0 0
  %62 = vmatpush2.bf16.msra.mxu0 0
  %63 = vmatprep.subr.bf16.mxu0 0
  %64 = vmatpush2.bf16.msra.mxu0 0
  %65 = vmatprep.subr.bf16.mxu0 0
  %66 = vmatpush2.bf16.msra.mxu0 0
  %67 = vmatprep.subr.bf16.mxu0 0
  %68 = vmatpush2.bf16.msra.mxu0 0
  %69 = vmatprep.subr.bf16.mxu0 0
  %70 = vmatpush2.bf16.msra.mxu0 0
  %71 = vmatprep.subr.bf16.mxu0 0
  %72 = vmatpush2.bf16.msra.mxu0 0
  %73 = vmatprep.subr.bf16.mxu0 0
  %74 = vmatpush2.bf16.msra.mxu0 0
  %75 = vmatprep.subr.bf16.mxu0 0
  %76 = vmatpush2.bf16.msra.mxu0 0
  %77 = vmatprep.mubr.bf16.mxu0 0
  %78 = vmatmul.mubr.bf16.gmra.mxu0 %v39
  %v79 = vpop.f32.mrf.mxu0
  %v80 = vadd.f32 %v26, %v79
  %v81 = vpop.f32.mrf.mxu0
  %v82 = vpop.f32.mrf.mxu0
  %v83 = vpop.f32.mrf.mxu0
  %84 = vdwg.mxu0
  %v85 = vld [vmem:[%s3] sm:$0xf]
  %v86 = vunpack.c.l.bf16 %v85
  %v87 = vadd.f32 %v80, %v86
  %v88 = vpack.c.bf16 %v87, %v87
  %vm89 = vcmask 519168
  %90 = vst.msk [vmem:[%s4] sm:$0xf] %vm89, %v88
  // Predicated region
  $region18: #{_lambda_.17} parent=0 // pred_check
    _
  $region19: #{_lambda_.17} parent=0 // pred_check_branch
    %92 = sbr.rel (0) target = $region21
  $region20: #{_lambda_.17} parent=0 // pred_region
    _
  $region21: #{_lambda_.17} parent=0 // pred_fallthru
    _
  // Predicated region
  $region22: #{_lambda_.17} parent=0 // pred_check
    _
  $region23: #{_lambda_.17} parent=0 // pred_check_branch
    %94 = sbr.rel (0) target = $region25
  $region24: #{_lambda_.17} parent=0 // pred_region
    _
  $region25: #{_lambda_.17} parent=0 // pred_fallthru
    _

// kernel: _lambda_.18
$region0: #{_lambda_.18}
  #allocation0 [shape = 'u32[]', space=smem, size = 0x4, offset = 0x4, fixed_abs, tag = 'smem constant byte address 0x4 - core index']
  #allocation1 [shape = 'u32[144,128]{1,0:T(1,128)}', space=vmem, size = 0x12000, scoped, tag = 'internal scratch']
  %s0 = inlined_call_operand.vmem [shape: bf16[24,64], index: 0, kind: input, shape index: {}]
  %s1 = inlined_call_operand.vmem [shape: bf16[16,24], index: 1, kind: input, shape index: {}]
  %s2 = inlined_call_operand.vmem [shape: f32[16,1], index: 2, kind: input, shape index: {}]
  %s3 = inlined_call_operand.vmem [shape: f32[24,1], index: 3, kind: input, shape index: {}]
  %s4 = inlined_call_operand.vmem [shape: f32[24,1], index: 4, kind: input, shape index: {}]
  %s5 = inlined_call_operand.vmem [shape: bf16[16,64], index: 5, kind: output, shape index: {}]
  %s6 = sld [smem:[#allocation0]]
  $region30: #{_lambda_.18} parent=0
    _
  %s8 = ssub.s32 1, %s6
  %s9 = scalar_select 0, %s8, %s6
  // Predicated region
  $region2: #{_lambda_.18} parent=0 // pred_check
    _
  $region3: #{_lambda_.18} parent=0 // pred_check_branch
    %11 = sbr.rel (0) target = $region5
  $region4: #{_lambda_.18} parent=0 // pred_region
    _
  $region5: #{_lambda_.18} parent=0 // pred_fallthru
    _
  // Predicated region
  $region6: #{_lambda_.18} parent=0 // pred_check
    _
  $region7: #{_lambda_.18} parent=0 // pred_check_branch
    %13 = sbr.rel (0) target = $region9
  $region8: #{_lambda_.18} parent=0 // pred_region
    _
  $region9: #{_lambda_.18} parent=0 // pred_fallthru
    _
  // Predicated region
  $region10: #{_lambda_.18} parent=0 // pred_check
    _
  $region11: #{_lambda_.18} parent=0 // pred_check_branch
    %15 = sbr.rel (0) target = $region13
  $region12: #{_lambda_.18} parent=0 // pred_region
    _
  $region13: #{_lambda_.18} parent=0 // pred_fallthru
    _
  // Predicated region
  $region14: #{_lambda_.18} parent=0 // pred_check
    _
  $region15: #{_lambda_.18} parent=0 // pred_check_branch
    %17 = sbr.rel (0) target = $region17
  $region16: #{_lambda_.18} parent=0 // pred_region
    _
  $region17: #{_lambda_.18} parent=0 // pred_fallthru
    _
  // Predicated region
  $region18: #{_lambda_.18} parent=0 // pred_check
    _
  $region19: #{_lambda_.18} parent=0 // pred_check_branch
    %19 = sbr.rel (0) target = $region21
  $region20: #{_lambda_.18} parent=0 // pred_region
    _
  $region21: #{_lambda_.18} parent=0 // pred_fallthru
    _
  %v21 = vld [vmem:[%s0] sm:$0xf]
  %v22 = vld [vmem:[%s0 + $0x4] sm:$0xf]
  %v23 = vld [vmem:[%s0 + $0x8] sm:$0xf]
  %v24 = vunpack.c.l.bf16 %v21
  %v25 = vunpack.c.l.bf16 %v22
  %v26 = vunpack.c.l.bf16 %v23
  %v27 = vld [vmem:[%s3] sm:$0xff]
  %v28 = vld [vmem:[%s3 + $0x8] sm:$0xff]
  %v29 = vld [vmem:[%s3 + $0x10] sm:$0xff]
  %31 = vset.pattern.permute.xlu0 0
  %32 = vperm.xlu0 %31, %v27
  %v33 = vpop.permute.xlu0 %32
  %36 = vset.pattern.permute.xlu0 0
  %37 = vperm.xlu0 %36, %v28
  %v38 = vpop.permute.xlu0 %37
  %41 = vset.pattern.permute.xlu0 0
  %42 = vperm.xlu0 %41, %v29
  %v43 = vpop.permute.xlu0 %42
  %v45 = vmul.f32 %v24, %v33
  %v46 = vmul.f32 %v25, %v38
  %v47 = vmul.f32 %v26, %v43
  %v48 = vld [vmem:[%s4] sm:$0xff]
  %v49 = vld [vmem:[%s4 + $0x8] sm:$0xff]
  %v50 = vld [vmem:[%s4 + $0x10] sm:$0xff]
  %52 = vset.pattern.permute.xlu0 0
  %53 = vperm.xlu0 %52, %v48
  %v54 = vpop.permute.xlu0 %53
  %57 = vset.pattern.permute.xlu0 0
  %58 = vperm.xlu0 %57, %v49
  %v59 = vpop.permute.xlu0 %58
  %62 = vset.pattern.permute.xlu0 0
  %63 = vperm.xlu0 %62, %v50
  %v64 = vpop.permute.xlu0 %63
  %v66 = vadd.f32 %v45, %v54
  %v67 = vadd.f32 %v46, %v59
  %v68 = vadd.f32 %v47, %v64
  %v69 = vmax.f32 %v66, 0.0
  %v70 = vmax.f32 %v67, 0.0
  %v71 = vmax.f32 %v68, 0.0
  %v72 = vpack.c.bf16 %v70, %v69
  %v73 = vpack.c.bf16 %v71, %v71
  %v74 = vld [vmem:[%s1] sm:$0xf]
  %v75 = vld [vmem:[%s1 + $0x4] sm:$0xf]
  %v76 = vld [vmem:[%s2] sm:$0xff]
  %v77 = vld [vmem:[%s2 + $0x8] sm:$0xff]
  %79 = vset.pattern.permute.xlu0 0
  %80 = vperm.xlu0 %79, %v76
  %v81 = vpop.permute.xlu0 %80
  %84 = vset.pattern.permute.xlu0 0
  %85 = vperm.xlu0 %84, %v77
  %v86 = vpop.permute.xlu0 %85
  %v90 = vunpack.c.l.b16 %v74
  %v91 = vunpack.c.l.b16 %v75
  %v92 = vpack.c.b16 %v91, %v90
  %vm93 = vcmask 195584
  %v95 = vsel %vm93, %v92, 0
  %vm97 = vcmask 1043456
  %v99 = vsel %vm97, %v73, 0
  %101 = vmatprep.subr.bf16.mxu0 0
  %102 = vmatpush1.bf16.msra.mxu0 0
  %103 = vmatprep.subr.bf16.mxu0 0
  %104 = vmatpush1.bf16.msra.mxu0 0
  %105 = vmatprep.subr.bf16.mxu0 0
  %106 = vmatpush1.bf16.msra.mxu0 0
  %107 = vmatprep.subr.bf16.mxu0 0
  %108 = vmatpush1.bf16.msra.mxu0 0
  %109 = vmatprep.subr.bf16.mxu0 0
  %110 = vmatpush1.bf16.msra.mxu0 0
  %111 = vmatprep.subr.bf16.mxu0 0
  %112 = vmatpush1.bf16.msra.mxu0 0
  %113 = vmatprep.subr.bf16.mxu0 0
  %114 = vmatpush1.bf16.msra.mxu0 %v99
  %115 = vmatprep.subr.bf16.mxu0 0
  %116 = vmatpush1.bf16.msra.mxu0 %v72
  %117 = vmatprep.subr.bf16.mxu0 0
  %118 = vmatpush2.bf16.msra.mxu0 0
  %119 = vmatprep.subr.bf16.mxu0 0
  %120 = vmatpush2.bf16.msra.mxu0 0
  %121 = vmatprep.subr.bf16.mxu0 0
  %122 = vmatpush2.bf16.msra.mxu0 0
  %123 = vmatprep.subr.bf16.mxu0 0
  %124 = vmatpush2.bf16.msra.mxu0 0
  %125 = vmatprep.subr.bf16.mxu0 0
  %126 = vmatpush2.bf16.msra.mxu0 0
  %127 = vmatprep.subr.bf16.mxu0 0
  %128 = vmatpush2.bf16.msra.mxu0 0
  %129 = vmatprep.subr.bf16.mxu0 0
  %130 = vmatpush2.bf16.msra.mxu0 0
  %131 = vmatprep.subr.bf16.mxu0 0
  %132 = vmatpush2.bf16.msra.mxu0 0
  %133 = vmatprep.mubr.bf16.mxu0 0
  %134 = vmatmul.mubr.bf16.gmra.mxu0 %v95
  %v135 = vpop.f32.mrf.mxu0
  %v136 = vadd.f32 %v81, %v135
  %v137 = vpop.f32.mrf.mxu0
  %v138 = vpop.f32.mrf.mxu0
  %v139 = vadd.f32 %v86, %v138
  %v140 = vpop.f32.mrf.mxu0
  %141 = vdwg.mxu0
  %v142 = vmax.f32 %v136, 0.0
  %v143 = vmax.f32 %v139, 0.0
  %v144 = vpack.c.bf16 %v143, %v142
  %v146 = vunpack.c.l.b16 %v144
  %v147 = vunpack.c.h.b16 %v144
  %v148 = vpack.c.b16 %v146, %v146
  %v149 = vpack.c.b16 %v147, %v147
  %vm152 = vcmask 519168
  %153 = vst.msk [vmem:[%s5] sm:$0xf] %vm152, %v148
  %154 = vst.msk [vmem:[%s5 + $0x4] sm:$0xf] %vm152, %v149
  // Predicated region
  $region22: #{_lambda_.18} parent=0 // pred_check
    _
  $region23: #{_lambda_.18} parent=0 // pred_check_branch
    %156 = sbr.rel (0) target = $region25
  $region24: #{_lambda_.18} parent=0 // pred_region
    _
  $region25: #{_lambda_.18} parent=0 // pred_fallthru
    _
  // Predicated region
  $region26: #{_lambda_.18} parent=0 // pred_check
    _
  $region27: #{_lambda_.18} parent=0 // pred_check_branch
    %158 = sbr.rel (0) target = $region29
  $region28: #{_lambda_.18} parent=0 // pred_region
    _
  $region29: #{_lambda_.18} parent=0 // pred_fallthru
    _

// kernel: tile.53
$region0: #{tile.53}
  #allocation0 [shape = 's32[1]{0}', space=sflag, size = 0x4, scoped, tag = 'scoped memory for tile.53']
  %s0 = inlined_call_operand.vmem [shape: f32[16], index: 0, kind: input, shape index: {}]
  %s1 = inlined_call_operand.vmem [shape: f32[3,16], index: 1, kind: output, shape index: {}]
  // Predicated region
  $region2: #{tile.53} parent=0 // pred_check
    _
  $region3: #{tile.53} parent=0 // pred_check_branch
    %3 = sbr.rel (0) target = $region5
  $region4: #{tile.53} parent=0 // pred_region
    _
  $region5: #{tile.53} parent=0 // pred_fallthru
    _
  %v4 = vld [vmem:[%s0] ss:$0 sm:$0xff]
  %5 = vst [vmem:[%s1] sm:$0xf] %v4

// kernel: tile.4
$region0: #{tile.4}
  %s0 = inlined_call_operand.vmem [shape: f32[3,16], index: 0, kind: input, shape index: {}]
  %s1 = inlined_call_operand.vmem [shape: f32[48,1], index: 1, kind: output, shape index: {}]
  $region1: #{tile.4} parent=0
    #allocation0 [shape = 'u8[4096]{0}', space=vmem, size = 0x1000, scoped, tag = 'scoped mem for input reshape']
    %s3 = sshll.u32 1, 4
    %s4 = ssub.s32 %s3, 1
    %v5 = vld [vmem:[%s0] sm:%s4]
    %6 = vst [vmem:[#allocation0] sm:%s4] %v5
    %v7 = vld [vmem:[#allocation0] sm:$0x7]
    %vm8 = vcmask 7168
    %9 = vst.msk [vmem:[%s1] ss:$16 sm:$0x3] %vm8, %v7
    %s10 = scalar_lea.vmem %s1, 30
    %11 = vst.msk [vmem:[%s10] sm:$0x4] %vm8, %v7
    %v12 = vld [vmem:[#allocation0] sm:$0x7]
    %13 = vrot.lane.b32.xlu0 %v12, 127
    %v14 = vpop.permute.xlu0 %13
    %vm15 = vcmask 7168
    %s16 = scalar_lea.vmem %s1, 1
    %17 = vst.msk [vmem:[%s16] ss:$16 sm:$0x3] %vm15, %v14
    %s18 = scalar_lea.vmem %s1, 31
    %19 = vst.msk [vmem:[%s18] sm:$0x4] %vm15, %v14
    %v20 = vld [vmem:[#allocation0] sm:$0x7]
    %21 = vrot.lane.b32.xlu0 %v20, 126
    %v22 = vpop.permute.xlu0 %21
    %vm23 = vcmask 7168
    %s24 = scalar_lea.vmem %s1, 2
    %25 = vst.msk [vmem:[%s24] ss:$16 sm:$0x3] %vm23, %v22
    %s26 = scalar_lea.vmem %s1, 32
    %27 = vst.msk [vmem:[%s26] sm:$0x4] %vm23, %v22
    %v28 = vld [vmem:[#allocation0] sm:$0x7]
    %29 = vrot.lane.b32.xlu0 %v28, 125
    %v30 = vpop.permute.xlu0 %29
    %vm31 = vcmask 7168
    %s32 = scalar_lea.vmem %s1, 3
    %33 = vst.msk [vmem:[%s32] ss:$16 sm:$0x3] %vm31, %v30
    %s34 = scalar_lea.vmem %s1, 33
    %35 = vst.msk [vmem:[%s34] sm:$0x4] %vm31, %v30
    %v36 = vld [vmem:[#allocation0] sm:$0x7]
    %37 = vrot.lane.b32.xlu0 %v36, 124
    %v38 = vpop.permute.xlu0 %37
    %vm39 = vcmask 7168
    %s40 = scalar_lea.vmem %s1, 4
    %41 = vst.msk [vmem:[%s40] ss:$16 sm:$0x3] %vm39, %v38
    %s42 = scalar_lea.vmem %s1, 34
    %43 = vst.msk [vmem:[%s42] sm:$0x4] %vm39, %v38
    %v44 = vld [vmem:[#allocation0] sm:$0x7]
    %45 = vrot.lane.b32.xlu0 %v44, 123
    %v46 = vpop.permute.xlu0 %45
    %vm47 = vcmask 7168
    %s48 = scalar_lea.vmem %s1, 5
    %49 = vst.msk [vmem:[%s48] ss:$16 sm:$0x3] %vm47, %v46
    %s50 = scalar_lea.vmem %s1, 35
    %51 = vst.msk [vmem:[%s50] sm:$0x4] %vm47, %v46
    %v52 = vld [vmem:[#allocation0] sm:$0x7]
    %53 = vrot.lane.b32.xlu0 %v52, 122
    %v54 = vpop.permute.xlu0 %53
    %vm55 = vcmask 7168
    %s56 = scalar_lea.vmem %s1, 6
    %57 = vst.msk [vmem:[%s56] ss:$16 sm:$0x3] %vm55, %v54
    %s58 = scalar_lea.vmem %s1, 36
    %59 = vst.msk [vmem:[%s58] sm:$0x4] %vm55, %v54
    %v60 = vld [vmem:[#allocation0] sm:$0x7]
    %61 = vrot.lane.b32.xlu0 %v60, 121
    %v62 = vpop.permute.xlu0 %61
    %vm63 = vcmask 7168
    %s64 = scalar_lea.vmem %s1, 7
    %65 = vst.msk [vmem:[%s64] ss:$16 sm:$0x3] %vm63, %v62
    %s66 = scalar_lea.vmem %s1, 37
    %67 = vst.msk [vmem:[%s66] sm:$0x4] %vm63, %v62
    %v68 = vld [vmem:[#allocation0] sm:$0x7]
    %69 = vrot.lane.b32.xlu0 %v68, 120
    %v70 = vpop.permute.xlu0 %69
    %vm71 = vcmask 7168
    %s72 = scalar_lea.vmem %s1, 8
    %73 = vst.msk [vmem:[%s72] ss:$16 sm:$0x3] %vm71, %v70
    %s74 = scalar_lea.vmem %s1, 38
    %75 = vst.msk [vmem:[%s74] sm:$0x4] %vm71, %v70
    %v76 = vld [vmem:[#allocation0] sm:$0x7]
    %77 = vrot.lane.b32.xlu0 %v76, 119
    %v78 = vpop.permute.xlu0 %77
    %vm79 = vcmask 7168
    %s80 = scalar_lea.vmem %s1, 9
    %81 = vst.msk [vmem:[%s80] ss:$16 sm:$0x3] %vm79, %v78
    %s82 = scalar_lea.vmem %s1, 39
    %83 = vst.msk [vmem:[%s82] sm:$0x4] %vm79, %v78
    %v84 = vld [vmem:[#allocation0] sm:$0x7]
    %85 = vrot.lane.b32.xlu0 %v84, 118
    %v86 = vpop.permute.xlu0 %85
    %vm87 = vcmask 7168
    %s88 = scalar_lea.vmem %s1, 10
    %89 = vst.msk [vmem:[%s88] ss:$16 sm:$0x3] %vm87, %v86
    %s90 = scalar_lea.vmem %s1, 40
    %91 = vst.msk [vmem:[%s90] sm:$0x4] %vm87, %v86
    %v92 = vld [vmem:[#allocation0] sm:$0x7]
    %93 = vrot.lane.b32.xlu0 %v92, 117
    %v94 = vpop.permute.xlu0 %93
    %vm95 = vcmask 7168
    %s96 = scalar_lea.vmem %s1, 11
    %97 = vst.msk [vmem:[%s96] ss:$16 sm:$0x3] %vm95, %v94
    %s98 = scalar_lea.vmem %s1, 41
    %99 = vst.msk [vmem:[%s98] sm:$0x4] %vm95, %v94
    %v100 = vld [vmem:[#allocation0] sm:$0x7]
    %101 = vrot.lane.b32.xlu0 %v100, 116
    %v102 = vpop.permute.xlu0 %101
    %vm103 = vcmask 7168
    %s104 = scalar_lea.vmem %s1, 12
    %105 = vst.msk [vmem:[%s104] ss:$16 sm:$0x3] %vm103, %v102
    %s106 = scalar_lea.vmem %s1, 42
    %107 = vst.msk [vmem:[%s106] sm:$0x4] %vm103, %v102
    %v108 = vld [vmem:[#allocation0] sm:$0x7]
    %109 = vrot.lane.b32.xlu0 %v108, 115
    %v110 = vpop.permute.xlu0 %109
    %vm111 = vcmask 7168
    %s112 = scalar_lea.vmem %s1, 13
    %113 = vst.msk [vmem:[%s112] ss:$16 sm:$0x3] %vm111, %v110
    %s114 = scalar_lea.vmem %s1, 43
    %115 = vst.msk [vmem:[%s114] sm:$0x4] %vm111, %v110
    %v116 = vld [vmem:[#allocation0] sm:$0x7]
    %117 = vrot.lane.b32.xlu0 %v116, 114
    %v118 = vpop.permute.xlu0 %117
    %vm119 = vcmask 7168
    %s120 = scalar_lea.vmem %s1, 14
    %121 = vst.msk [vmem:[%s120] ss:$16 sm:$0x3] %vm119, %v118
    %s122 = scalar_lea.vmem %s1, 44
    %123 = vst.msk [vmem:[%s122] sm:$0x4] %vm119, %v118
    %v124 = vld [vmem:[#allocation0] sm:$0x7]
    %125 = vrot.lane.b32.xlu0 %v124, 113
    %v126 = vpop.permute.xlu0 %125
    %vm127 = vcmask 7168
    %s128 = scalar_lea.vmem %s1, 15
    %129 = vst.msk [vmem:[%s128] ss:$16 sm:$0x3] %vm127, %v126
    %s130 = scalar_lea.vmem %s1, 45
    %131 = vst.msk [vmem:[%s130] sm:$0x4] %vm127, %v126

// kernel: _lambda_.19
$region0: #{_lambda_.19}
  #allocation0 [shape = 'u32[]', space=smem, size = 0x4, offset = 0x4, fixed_abs, tag = 'smem constant byte address 0x4 - core index']
  #allocation1 [shape = 'u32[144,128]{1,0:T(1,128)}', space=vmem, size = 0x12000, scoped, tag = 'internal scratch']
  %s0 = inlined_call_operand.vmem [shape: bf16[48,64], index: 0, kind: input, shape index: {}]
  %s1 = inlined_call_operand.vmem [shape: bf16[16,48], index: 1, kind: input, shape index: {}]
  %s2 = inlined_call_operand.vmem [shape: f32[16,1], index: 2, kind: input, shape index: {}]
  %s3 = inlined_call_operand.vmem [shape: bf16[16,64], index: 3, kind: input, shape index: {}]
  %s4 = inlined_call_operand.vmem [shape: bf16[16,64], index: 4, kind: output, shape index: {}]
  %s5 = sld [smem:[#allocation0]]
  $region26: #{_lambda_.19} parent=0
    _
  %s7 = ssub.s32 1, %s5
  %s8 = scalar_select 0, %s7, %s5
  // Predicated region
  $region2: #{_lambda_.19} parent=0 // pred_check
    _
  $region3: #{_lambda_.19} parent=0 // pred_check_branch
    %10 = sbr.rel (0) target = $region5
  $region4: #{_lambda_.19} parent=0 // pred_region
    _
  $region5: #{_lambda_.19} parent=0 // pred_fallthru
    _
  // Predicated region
  $region6: #{_lambda_.19} parent=0 // pred_check
    _
  $region7: #{_lambda_.19} parent=0 // pred_check_branch
    %12 = sbr.rel (0) target = $region9
  $region8: #{_lambda_.19} parent=0 // pred_region
    _
  $region9: #{_lambda_.19} parent=0 // pred_fallthru
    _
  // Predicated region
  $region10: #{_lambda_.19} parent=0 // pred_check
    _
  $region11: #{_lambda_.19} parent=0 // pred_check_branch
    %14 = sbr.rel (0) target = $region13
  $region12: #{_lambda_.19} parent=0 // pred_region
    _
  $region13: #{_lambda_.19} parent=0 // pred_fallthru
    _
  // Predicated region
  $region14: #{_lambda_.19} parent=0 // pred_check
    _
  $region15: #{_lambda_.19} parent=0 // pred_check_branch
    %16 = sbr.rel (0) target = $region17
  $region16: #{_lambda_.19} parent=0 // pred_region
    _
  $region17: #{_lambda_.19} parent=0 // pred_fallthru
    _
  %v18 = vld [vmem:[%s0] sm:$0xf]
  %v19 = vld [vmem:[%s0 + $0x4] sm:$0xf]
  %v20 = vld [vmem:[%s0 + $0x8] sm:$0xf]
  %v21 = vld [vmem:[%s0 + $0xc] sm:$0xf]
  %v22 = vld [vmem:[%s0 + $0x10] sm:$0xf]
  %v23 = vld [vmem:[%s0 + $0x14] sm:$0xf]
  %v24 = vld [vmem:[%s1] sm:$0xf]
  %v25 = vld [vmem:[%s1 + $0x4] sm:$0xf]
  %v26 = vld [vmem:[%s2] sm:$0xff]
  %v27 = vld [vmem:[%s2 + $0x8] sm:$0xff]
  %29 = vset.pattern.permute.xlu0 0
  %30 = vperm.xlu0 %29, %v26
  %v31 = vpop.permute.xlu0 %30
  %34 = vset.pattern.permute.xlu0 0
  %35 = vperm.xlu0 %34, %v27
  %v36 = vpop.permute.xlu0 %35
  %v40 = vunpack.c.l.b16 %v24
  %v41 = vunpack.c.l.b16 %v25
  %v42 = vpack.c.b16 %v41, %v40
  %v49 = vunpack.c.l.b16 %v18
  %v50 = vunpack.c.l.b16 %v19
  %v51 = vunpack.c.l.b16 %v20
  %v52 = vunpack.c.l.b16 %v21
  %v53 = vunpack.c.l.b16 %v22
  %v54 = vunpack.c.l.b16 %v23
  %v55 = vpack.c.b16 %v50, %v49
  %v56 = vpack.c.b16 %v52, %v51
  %v57 = vpack.c.b16 %v54, %v53
  %vm61 = vcmask 392192
  %v63 = vsel %vm61, %v42, 0
  %65 = vmatprep.subr.bf16.mxu0 0
  %66 = vmatpush1.bf16.msra.mxu0 0
  %67 = vmatprep.subr.bf16.mxu0 0
  %68 = vmatpush1.bf16.msra.mxu0 0
  %69 = vmatprep.subr.bf16.mxu0 0
  %70 = vmatpush1.bf16.msra.mxu0 0
  %71 = vmatprep.subr.bf16.mxu0 0
  %72 = vmatpush1.bf16.msra.mxu0 0
  %73 = vmatprep.subr.bf16.mxu0 0
  %74 = vmatpush1.bf16.msra.mxu0 0
  %75 = vmatprep.subr.bf16.mxu0 0
  %76 = vmatpush1.bf16.msra.mxu0 %v57
  %77 = vmatprep.subr.bf16.mxu0 0
  %78 = vmatpush1.bf16.msra.mxu0 %v56
  %79 = vmatprep.subr.bf16.mxu0 0
  %80 = vmatpush1.bf16.msra.mxu0 %v55
  %81 = vmatprep.subr.bf16.mxu0 0
  %82 = vmatpush2.bf16.msra.mxu0 0
  %83 = vmatprep.subr.bf16.mxu0 0
  %84 = vmatpush2.bf16.msra.mxu0 0
  %85 = vmatprep.subr.bf16.mxu0 0
  %86 = vmatpush2.bf16.msra.mxu0 0
  %87 = vmatprep.subr.bf16.mxu0 0
  %88 = vmatpush2.bf16.msra.mxu0 0
  %89 = vmatprep.subr.bf16.mxu0 0
  %90 = vmatpush2.bf16.msra.mxu0 0
  %91 = vmatprep.subr.bf16.mxu0 0
  %92 = vmatpush2.bf16.msra.mxu0 0
  %93 = vmatprep.subr.bf16.mxu0 0
  %94 = vmatpush2.bf16.msra.mxu0 0
  %95 = vmatprep.subr.bf16.mxu0 0
  %96 = vmatpush2.bf16.msra.mxu0 0
  %97 = vmatprep.mubr.bf16.mxu0 0
  %98 = vmatmul.mubr.bf16.gmra.mxu0 %v63
  %v99 = vpop.f32.mrf.mxu0
  %v100 = vadd.f32 %v31, %v99
  %v101 = vpop.f32.mrf.mxu0
  %v102 = vpop.f32.mrf.mxu0
  %v103 = vadd.f32 %v36, %v102
  %v104 = vpop.f32.mrf.mxu0
  %105 = vdwg.mxu0
  %v106 = vld [vmem:[%s3] sm:$0xf]
  %v107 = vld [vmem:[%s3 + $0x4] sm:$0xf]
  %v108 = vunpack.c.l.bf16 %v106
  %v109 = vunpack.c.l.bf16 %v107
  %v110 = vadd.f32 %v100, %v108
  %v111 = vadd.f32 %v103, %v109
  %v112 = vpack.c.bf16 %v111, %v110
  %v114 = vunpack.c.l.b16 %v112
  %v115 = vunpack.c.h.b16 %v112
  %v116 = vpack.c.b16 %v114, %v114
  %v117 = vpack.c.b16 %v115, %v115
  %vm120 = vcmask 519168
  %121 = vst.msk [vmem:[%s4] sm:$0xf] %vm120, %v116
  %122 = vst.msk [vmem:[%s4 + $0x4] sm:$0xf] %vm120, %v117
  // Predicated region
  $region18: #{_lambda_.19} parent=0 // pred_check
    _
  $region19: #{_lambda_.19} parent=0 // pred_check_branch
    %124 = sbr.rel (0) target = $region21
  $region20: #{_lambda_.19} parent=0 // pred_region
    _
  $region21: #{_lambda_.19} parent=0 // pred_fallthru
    _
  // Predicated region
  $region22: #{_lambda_.19} parent=0 // pred_check
    _
  $region23: #{_lambda_.19} parent=0 // pred_check_branch
    %126 = sbr.rel (0) target = $region25
  $region24: #{_lambda_.19} parent=0 // pred_region
    _
  $region25: #{_lambda_.19} parent=0 // pred_fallthru
    _

// kernel: _lambda_.21
$region0: #{_lambda_.21}
  #allocation0 [shape = 'u32[]', space=smem, size = 0x4, offset = 0x4, fixed_abs, tag = 'smem constant byte address 0x4 - core index']
  #allocation1 [shape = 'u32[144,128]{1,0:T(1,128)}', space=vmem, size = 0x12000, scoped, tag = 'internal scratch']
  %s0 = inlined_call_operand.vmem [shape: bf16[16,32], index: 0, kind: input, shape index: {}]
  %s1 = inlined_call_operand.vmem [shape: bf16[16,32], index: 1, kind: input, shape index: {}]
  %s2 = inlined_call_operand.vmem [shape: bf16[16,32], index: 2, kind: output, shape index: {}]
  %s3 = sld [smem:[#allocation0]]
  $region18: #{_lambda_.21} parent=0
    _
  %s5 = ssub.s32 1, %s3
  %s6 = scalar_select 0, %s5, %s3
  // Predicated region
  $region2: #{_lambda_.21} parent=0 // pred_check
    _
  $region3: #{_lambda_.21} parent=0 // pred_check_branch
    %8 = sbr.rel (0) target = $region5
  $region4: #{_lambda_.21} parent=0 // pred_region
    _
  $region5: #{_lambda_.21} parent=0 // pred_fallthru
    _
  // Predicated region
  $region6: #{_lambda_.21} parent=0 // pred_check
    _
  $region7: #{_lambda_.21} parent=0 // pred_check_branch
    %10 = sbr.rel (0) target = $region9
  $region8: #{_lambda_.21} parent=0 // pred_region
    _
  $region9: #{_lambda_.21} parent=0 // pred_fallthru
    _
  %v11 = vld [vmem:[%s0] sm:$0xf]
  %v12 = vld [vmem:[%s0 + $0x4] sm:$0xf]
  %v13 = vld [vmem:[%s1] sm:$0xf]
  %v14 = vld [vmem:[%s1 + $0x4] sm:$0xf]
  %v15 = vmax.bf16 %v11, %v13
  %v16 = vmax.bf16 %v12, %v14
  %vm17 = vcmask 257024
  %18 = vst.msk [vmem:[%s2] sm:$0xf] %vm17, %v15
  %19 = vst.msk [vmem:[%s2 + $0x4] sm:$0xf] %vm17, %v16
  // Predicated region
  $region10: #{_lambda_.21} parent=0 // pred_check
    _
  $region11: #{_lambda_.21} parent=0 // pred_check_branch
    %21 = sbr.rel (0) target = $region13
  $region12: #{_lambda_.21} parent=0 // pred_region
    _
  $region13: #{_lambda_.21} parent=0 // pred_fallthru
    _
  // Predicated region
  $region14: #{_lambda_.21} parent=0 // pred_check
    _
  $region15: #{_lambda_.21} parent=0 // pred_check_branch
    %23 = sbr.rel (0) target = $region17
  $region16: #{_lambda_.21} parent=0 // pred_region
    _
  $region17: #{_lambda_.21} parent=0 // pred_fallthru
    _

// kernel: _lambda_.23
$region0: #{_lambda_.23}
  #allocation0 [shape = 'u32[]', space=smem, size = 0x4, offset = 0x4, fixed_abs, tag = 'smem constant byte address 0x4 - core index']
  #allocation1 [shape = 'u32[144,128]{1,0:T(1,128)}', space=vmem, size = 0x12000, scoped, tag = 'internal scratch']
  %s0 = inlined_call_operand.vmem [shape: bf16[16,32], index: 0, kind: input, shape index: {}]
  %s1 = inlined_call_operand.vmem [shape: f32[16,1], index: 1, kind: input, shape index: {}]
  %s2 = inlined_call_operand.vmem [shape: f32[16,1], index: 2, kind: input, shape index: {}]
  %s3 = inlined_call_operand.vmem [shape: f32[16,32], index: 3, kind: output, shape index: {}]
  %s4 = sld [smem:[#allocation0]]
  $region22: #{_lambda_.23} parent=0
    _
  %s6 = ssub.s32 1, %s4
  %s7 = scalar_select 0, %s6, %s4
  // Predicated region
  $region2: #{_lambda_.23} parent=0 // pred_check
    _
  $region3: #{_lambda_.23} parent=0 // pred_check_branch
    %9 = sbr.rel (0) target = $region5
  $region4: #{_lambda_.23} parent=0 // pred_region
    _
  $region5: #{_lambda_.23} parent=0 // pred_fallthru
    _
  // Predicated region
  $region6: #{_lambda_.23} parent=0 // pred_check
    _
  $region7: #{_lambda_.23} parent=0 // pred_check_branch
    %11 = sbr.rel (0) target = $region9
  $region8: #{_lambda_.23} parent=0 // pred_region
    _
  $region9: #{_lambda_.23} parent=0 // pred_fallthru
    _
  // Predicated region
  $region10: #{_lambda_.23} parent=0 // pred_check
    _
  $region11: #{_lambda_.23} parent=0 // pred_check_branch
    %13 = sbr.rel (0) target = $region13
  $region12: #{_lambda_.23} parent=0 // pred_region
    _
  $region13: #{_lambda_.23} parent=0 // pred_fallthru
    _
  %v14 = vld [vmem:[%s0] sm:$0xf]
  %v15 = vld [vmem:[%s0 + $0x4] sm:$0xf]
  %v16 = vunpack.c.l.bf16 %v14
  %v17 = vunpack.c.l.bf16 %v15
  %v18 = vld [vmem:[%s1] sm:$0xff]
  %v19 = vld [vmem:[%s1 + $0x8] sm:$0xff]
  %21 = vset.pattern.permute.xlu0 0
  %22 = vperm.xlu0 %21, %v18
  %v23 = vpop.permute.xlu0 %22
  %26 = vset.pattern.permute.xlu0 0
  %27 = vperm.xlu0 %26, %v19
  %v28 = vpop.permute.xlu0 %27
  %v30 = vmul.f32 %v16, %v23
  %v31 = vmul.f32 %v17, %v28
  %v32 = vld [vmem:[%s2] sm:$0xff]
  %v33 = vld [vmem:[%s2 + $0x8] sm:$0xff]
  %35 = vset.pattern.permute.xlu0 0
  %36 = vperm.xlu0 %35, %v32
  %v37 = vpop.permute.xlu0 %36
  %40 = vset.pattern.permute.xlu0 0
  %41 = vperm.xlu0 %40, %v33
  %v42 = vpop.permute.xlu0 %41
  %v44 = vadd.f32 %v30, %v37
  %v45 = vadd.f32 %v31, %v42
  %v46 = vmax.f32 %v44, 0.0
  %v47 = vmax.f32 %v45, 0.0
  %vm48 = vcmask 261120
  %49 = vst.msk [vmem:[%s3] sm:$0xff] %vm48, %v46
  %50 = vst.msk [vmem:[%s3 + $0x8] sm:$0xff] %vm48, %v47
  // Predicated region
  $region14: #{_lambda_.23} parent=0 // pred_check
    _
  $region15: #{_lambda_.23} parent=0 // pred_check_branch
    %52 = sbr.rel (0) target = $region17
  $region16: #{_lambda_.23} parent=0 // pred_region
    _
  $region17: #{_lambda_.23} parent=0 // pred_fallthru
    _
  // Predicated region
  $region18: #{_lambda_.23} parent=0 // pred_check
    _
  $region19: #{_lambda_.23} parent=0 // pred_check_branch
    %54 = sbr.rel (0) target = $region21
  $region20: #{_lambda_.23} parent=0 // pred_region
    _
  $region21: #{_lambda_.23} parent=0 // pred_fallthru
    _

// kernel: _lambda_.20
$region0: #{_lambda_.20}
  #allocation0 [shape = 'u32[]', space=smem, size = 0x4, offset = 0x4, fixed_abs, tag = 'smem constant byte address 0x4 - core index']
  #allocation1 [shape = 'u32[144,128]{1,0:T(1,128)}', space=vmem, size = 0x12000, scoped, tag = 'internal scratch']
  %s0 = inlined_call_operand.vmem [shape: bf16[48,32], index: 0, kind: input, shape index: {}]
  %s1 = inlined_call_operand.vmem [shape: bf16[16,48], index: 1, kind: input, shape index: {}]
  %s2 = inlined_call_operand.vmem [shape: f32[16,1], index: 2, kind: input, shape index: {}]
  %s3 = inlined_call_operand.vmem [shape: f32[48,1], index: 3, kind: input, shape index: {}]
  %s4 = inlined_call_operand.vmem [shape: f32[48,1], index: 4, kind: input, shape index: {}]
  %s5 = inlined_call_operand.vmem [shape: bf16[16,32], index: 5, kind: output, shape index: {}]
  %s6 = sld [smem:[#allocation0]]
  $region30: #{_lambda_.20} parent=0
    _
  %s8 = ssub.s32 1, %s6
  %s9 = scalar_select 0, %s8, %s6
  // Predicated region
  $region2: #{_lambda_.20} parent=0 // pred_check
    _
  $region3: #{_lambda_.20} parent=0 // pred_check_branch
    %11 = sbr.rel (0) target = $region5
  $region4: #{_lambda_.20} parent=0 // pred_region
    _
  $region5: #{_lambda_.20} parent=0 // pred_fallthru
    _
  // Predicated region
  $region6: #{_lambda_.20} parent=0 // pred_check
    _
  $region7: #{_lambda_.20} parent=0 // pred_check_branch
    %13 = sbr.rel (0) target = $region9
  $region8: #{_lambda_.20} parent=0 // pred_region
    _
  $region9: #{_lambda_.20} parent=0 // pred_fallthru
    _
  // Predicated region
  $region10: #{_lambda_.20} parent=0 // pred_check
    _
  $region11: #{_lambda_.20} parent=0 // pred_check_branch
    %15 = sbr.rel (0) target = $region13
  $region12: #{_lambda_.20} parent=0 // pred_region
    _
  $region13: #{_lambda_.20} parent=0 // pred_fallthru
    _
  // Predicated region
  $region14: #{_lambda_.20} parent=0 // pred_check
    _
  $region15: #{_lambda_.20} parent=0 // pred_check_branch
    %17 = sbr.rel (0) target = $region17
  $region16: #{_lambda_.20} parent=0 // pred_region
    _
  $region17: #{_lambda_.20} parent=0 // pred_fallthru
    _
  // Predicated region
  $region18: #{_lambda_.20} parent=0 // pred_check
    _
  $region19: #{_lambda_.20} parent=0 // pred_check_branch
    %19 = sbr.rel (0) target = $region21
  $region20: #{_lambda_.20} parent=0 // pred_region
    _
  $region21: #{_lambda_.20} parent=0 // pred_fallthru
    _
  %v21 = vld [vmem:[%s0] sm:$0xf]
  %v22 = vld [vmem:[%s0 + $0x4] sm:$0xf]
  %v23 = vld [vmem:[%s0 + $0x8] sm:$0xf]
  %v24 = vld [vmem:[%s0 + $0xc] sm:$0xf]
  %v25 = vld [vmem:[%s0 + $0x10] sm:$0xf]
  %v26 = vld [vmem:[%s0 + $0x14] sm:$0xf]
  %v27 = vunpack.c.l.bf16 %v21
  %v28 = vunpack.c.l.bf16 %v22
  %v29 = vunpack.c.l.bf16 %v23
  %v30 = vunpack.c.l.bf16 %v24
  %v31 = vunpack.c.l.bf16 %v25
  %v32 = vunpack.c.l.bf16 %v26
  %v33 = vld [vmem:[%s3] sm:$0xff]
  %v34 = vld [vmem:[%s3 + $0x8] sm:$0xff]
  %v35 = vld [vmem:[%s3 + $0x10] sm:$0xff]
  %v36 = vld [vmem:[%s3 + $0x18] sm:$0xff]
  %v37 = vld [vmem:[%s3 + $0x20] sm:$0xff]
  %v38 = vld [vmem:[%s3 + $0x28] sm:$0xff]
  %40 = vset.pattern.permute.xlu0 0
  %41 = vperm.xlu0 %40, %v33
  %v42 = vpop.permute.xlu0 %41
  %45 = vset.pattern.permute.xlu0 0
  %46 = vperm.xlu0 %45, %v34
  %v47 = vpop.permute.xlu0 %46
  %50 = vset.pattern.permute.xlu0 0
  %51 = vperm.xlu0 %50, %v35
  %v52 = vpop.permute.xlu0 %51
  %55 = vset.pattern.permute.xlu0 0
  %56 = vperm.xlu0 %55, %v36
  %v57 = vpop.permute.xlu0 %56
  %60 = vset.pattern.permute.xlu0 0
  %61 = vperm.xlu0 %60, %v37
  %v62 = vpop.permute.xlu0 %61
  %65 = vset.pattern.permute.xlu0 0
  %66 = vperm.xlu0 %65, %v38
  %v67 = vpop.permute.xlu0 %66
  %v69 = vmul.f32 %v27, %v42
  %v70 = vmul.f32 %v28, %v47
  %v71 = vmul.f32 %v29, %v52
  %v72 = vmul.f32 %v30, %v57
  %v73 = vmul.f32 %v31, %v62
  %v74 = vmul.f32 %v32, %v67
  %v75 = vld [vmem:[%s4] sm:$0xff]
  %v76 = vld [vmem:[%s4 + $0x8] sm:$0xff]
  %v77 = vld [vmem:[%s4 + $0x10] sm:$0xff]
  %v78 = vld [vmem:[%s4 + $0x18] sm:$0xff]
  %v79 = vld [vmem:[%s4 + $0x20] sm:$0xff]
  %v80 = vld [vmem:[%s4 + $0x28] sm:$0xff]
  %82 = vset.pattern.permute.xlu0 0
  %83 = vperm.xlu0 %82, %v75
  %v84 = vpop.permute.xlu0 %83
  %87 = vset.pattern.permute.xlu0 0
  %88 = vperm.xlu0 %87, %v76
  %v89 = vpop.permute.xlu0 %88
  %92 = vset.pattern.permute.xlu0 0
  %93 = vperm.xlu0 %92, %v77
  %v94 = vpop.permute.xlu0 %93
  %97 = vset.pattern.permute.xlu0 0
  %98 = vperm.xlu0 %97, %v78
  %v99 = vpop.permute.xlu0 %98
  %102 = vset.pattern.permute.xlu0 0
  %103 = vperm.xlu0 %102, %v79
  %v104 = vpop.permute.xlu0 %103
  %107 = vset.pattern.permute.xlu0 0
  %108 = vperm.xlu0 %107, %v80
  %v109 = vpop.permute.xlu0 %108
  %v111 = vadd.f32 %v69, %v84
  %v112 = vadd.f32 %v70, %v89
  %v113 = vadd.f32 %v71, %v94
  %v114 = vadd.f32 %v72, %v99
  %v115 = vadd.f32 %v73, %v104
  %v116 = vadd.f32 %v74, %v109
  %v117 = vmax.f32 %v111, 0.0
  %v118 = vmax.f32 %v112, 0.0
  %v119 = vmax.f32 %v113, 0.0
  %v120 = vmax.f32 %v114, 0.0
  %v121 = vmax.f32 %v115, 0.0
  %v122 = vmax.f32 %v116, 0.0
  %v123 = vpack.c.bf16 %v118, %v117
  %v124 = vpack.c.bf16 %v120, %v119
  %v125 = vpack.c.bf16 %v122, %v121
  %v126 = vld [vmem:[%s1] sm:$0xf]
  %v127 = vld [vmem:[%s1 + $0x4] sm:$0xf]
  %v128 = vld [vmem:[%s2] sm:$0xff]
  %v129 = vld [vmem:[%s2 + $0x8] sm:$0xff]
  %131 = vset.pattern.permute.xlu0 0
  %132 = vperm.xlu0 %131, %v128
  %v133 = vpop.permute.xlu0 %132
  %136 = vset.pattern.permute.xlu0 0
  %137 = vperm.xlu0 %136, %v129
  %v138 = vpop.permute.xlu0 %137
  %v142 = vunpack.c.l.b16 %v126
  %v143 = vunpack.c.l.b16 %v127
  %v144 = vpack.c.b16 %v143, %v142
  %vm145 = vcmask 392192
  %v147 = vsel %vm145, %v144, 0
  %149 = vmatprep.subr.bf16.mxu0 0
  %150 = vmatpush1.bf16.msra.mxu0 0
  %151 = vmatprep.subr.bf16.mxu0 0
  %152 = vmatpush1.bf16.msra.mxu0 0
  %153 = vmatprep.subr.bf16.mxu0 0
  %154 = vmatpush1.bf16.msra.mxu0 0
  %155 = vmatprep.subr.bf16.mxu0 0
  %156 = vmatpush1.bf16.msra.mxu0 0
  %157 = vmatprep.subr.bf16.mxu0 0
  %158 = vmatpush1.bf16.msra.mxu0 0
  %159 = vmatprep.subr.bf16.mxu0 0
  %160 = vmatpush1.bf16.msra.mxu0 %v125
  %161 = vmatprep.subr.bf16.mxu0 0
  %162 = vmatpush1.bf16.msra.mxu0 %v124
  %163 = vmatprep.subr.bf16.mxu0 0
  %164 = vmatpush1.bf16.msra.mxu0 %v123
  %165 = vmatprep.subr.bf16.mxu0 0
  %166 = vmatpush2.bf16.msra.mxu0 0
  %167 = vmatprep.subr.bf16.mxu0 0
  %168 = vmatpush2.bf16.msra.mxu0 0
  %169 = vmatprep.subr.bf16.mxu0 0
  %170 = vmatpush2.bf16.msra.mxu0 0
  %171 = vmatprep.subr.bf16.mxu0 0
  %172 = vmatpush2.bf16.msra.mxu0 0
  %173 = vmatprep.subr.bf16.mxu0 0
  %174 = vmatpush2.bf16.msra.mxu0 0
  %175 = vmatprep.subr.bf16.mxu0 0
  %176 = vmatpush2.bf16.msra.mxu0 0
  %177 = vmatprep.subr.bf16.mxu0 0
  %178 = vmatpush2.bf16.msra.mxu0 0
  %179 = vmatprep.subr.bf16.mxu0 0
  %180 = vmatpush2.bf16.msra.mxu0 0
  %181 = vmatprep.mubr.bf16.mxu0 0
  %182 = vmatmul.mubr.bf16.gmra.mxu0 %v147
  %v183 = vpop.f32.mrf.mxu0
  %v184 = vadd.f32 %v133, %v183
  %v185 = vpop.f32.mrf.mxu0
  %v186 = vpop.f32.mrf.mxu0
  %v187 = vadd.f32 %v138, %v186
  %v188 = vpop.f32.mrf.mxu0
  %189 = vdwg.mxu0
  %v190 = vmax.f32 %v184, 0.0
  %v191 = vmax.f32 %v187, 0.0
  %v192 = vpack.c.bf16 %v191, %v190
  %v194 = vunpack.c.l.b16 %v192
  %v195 = vunpack.c.h.b16 %v192
  %v196 = vpack.c.b16 %v194, %v194
  %v197 = vpack.c.b16 %v195, %v195
  %vm200 = vcmask 257024
  %201 = vst.msk [vmem:[%s5] sm:$0xf] %vm200, %v196
  %202 = vst.msk [vmem:[%s5 + $0x4] sm:$0xf] %vm200, %v197
  // Predicated region
  $region22: #{_lambda_.20} parent=0 // pred_check
    _
  $region23: #{_lambda_.20} parent=0 // pred_check_branch
    %204 = sbr.rel (0) target = $region25
  $region24: #{_lambda_.20} parent=0 // pred_region
    _
  $region25: #{_lambda_.20} parent=0 // pred_fallthru
    _
  // Predicated region
  $region26: #{_lambda_.20} parent=0 // pred_check
    _
  $region27: #{_lambda_.20} parent=0 // pred_check_branch
    %206 = sbr.rel (0) target = $region29
  $region28: #{_lambda_.20} parent=0 // pred_region
    _
  $region29: #{_lambda_.20} parent=0 // pred_fallthru
    _

// kernel: _lambda_.22
$region0: #{_lambda_.22}
  #allocation0 [shape = 'u32[]', space=smem, size = 0x4, offset = 0x4, fixed_abs, tag = 'smem constant byte address 0x4 - core index']
  #allocation1 [shape = 'u32[144,128]{1,0:T(1,128)}', space=vmem, size = 0x12000, scoped, tag = 'internal scratch']
  %s0 = inlined_call_operand.vmem [shape: bf16[48,32], index: 0, kind: input, shape index: {}]
  %s1 = inlined_call_operand.vmem [shape: bf16[16,48], index: 1, kind: input, shape index: {}]
  %s2 = inlined_call_operand.vmem [shape: f32[16,1], index: 2, kind: input, shape index: {}]
  %s3 = inlined_call_operand.vmem [shape: bf16[16,32], index: 3, kind: input, shape index: {}]
  %s4 = inlined_call_operand.vmem [shape: bf16[16,32], index: 4, kind: output, shape index: {}]
  %s5 = sld [smem:[#allocation0]]
  $region26: #{_lambda_.22} parent=0
    _
  %s7 = ssub.s32 1, %s5
  %s8 = scalar_select 0, %s7, %s5
  // Predicated region
  $region2: #{_lambda_.22} parent=0 // pred_check
    _
  $region3: #{_lambda_.22} parent=0 // pred_check_branch
    %10 = sbr.rel (0) target = $region5
  $region4: #{_lambda_.22} parent=0 // pred_region
    _
  $region5: #{_lambda_.22} parent=0 // pred_fallthru
    _
  // Predicated region
  $region6: #{_lambda_.22} parent=0 // pred_check
    _
  $region7: #{_lambda_.22} parent=0 // pred_check_branch
    %12 = sbr.rel (0) target = $region9
  $region8: #{_lambda_.22} parent=0 // pred_region
    _
  $region9: #{_lambda_.22} parent=0 // pred_fallthru
    _
  // Predicated region
  $region10: #{_lambda_.22} parent=0 // pred_check
    _
  $region11: #{_lambda_.22} parent=0 // pred_check_branch
    %14 = sbr.rel (0) target = $region13
  $region12: #{_lambda_.22} parent=0 // pred_region
    _
  $region13: #{_lambda_.22} parent=0 // pred_fallthru
    _
  // Predicated region
  $region14: #{_lambda_.22} parent=0 // pred_check
    _
  $region15: #{_lambda_.22} parent=0 // pred_check_branch
    %16 = sbr.rel (0) target = $region17
  $region16: #{_lambda_.22} parent=0 // pred_region
    _
  $region17: #{_lambda_.22} parent=0 // pred_fallthru
    _
  %v18 = vld [vmem:[%s0] sm:$0xf]
  %v19 = vld [vmem:[%s0 + $0x4] sm:$0xf]
  %v20 = vld [vmem:[%s0 + $0x8] sm:$0xf]
  %v21 = vld [vmem:[%s0 + $0xc] sm:$0xf]
  %v22 = vld [vmem:[%s0 + $0x10] sm:$0xf]
  %v23 = vld [vmem:[%s0 + $0x14] sm:$0xf]
  %v24 = vld [vmem:[%s1] sm:$0xf]
  %v25 = vld [vmem:[%s1 + $0x4] sm:$0xf]
  %v26 = vld [vmem:[%s2] sm:$0xff]
  %v27 = vld [vmem:[%s2 + $0x8] sm:$0xff]
  %29 = vset.pattern.permute.xlu0 0
  %30 = vperm.xlu0 %29, %v26
  %v31 = vpop.permute.xlu0 %30
  %34 = vset.pattern.permute.xlu0 0
  %35 = vperm.xlu0 %34, %v27
  %v36 = vpop.permute.xlu0 %35
  %v40 = vunpack.c.l.b16 %v24
  %v41 = vunpack.c.l.b16 %v25
  %v42 = vpack.c.b16 %v41, %v40
  %v49 = vunpack.c.l.b16 %v18
  %v50 = vunpack.c.l.b16 %v19
  %v51 = vunpack.c.l.b16 %v20
  %v52 = vunpack.c.l.b16 %v21
  %v53 = vunpack.c.l.b16 %v22
  %v54 = vunpack.c.l.b16 %v23
  %v55 = vpack.c.b16 %v50, %v49
  %v56 = vpack.c.b16 %v52, %v51
  %v57 = vpack.c.b16 %v54, %v53
  %vm61 = vcmask 392192
  %v63 = vsel %vm61, %v42, 0
  %65 = vmatprep.subr.bf16.mxu0 0
  %66 = vmatpush1.bf16.msra.mxu0 0
  %67 = vmatprep.subr.bf16.mxu0 0
  %68 = vmatpush1.bf16.msra.mxu0 0
  %69 = vmatprep.subr.bf16.mxu0 0
  %70 = vmatpush1.bf16.msra.mxu0 0
  %71 = vmatprep.subr.bf16.mxu0 0
  %72 = vmatpush1.bf16.msra.mxu0 0
  %73 = vmatprep.subr.bf16.mxu0 0
  %74 = vmatpush1.bf16.msra.mxu0 0
  %75 = vmatprep.subr.bf16.mxu0 0
  %76 = vmatpush1.bf16.msra.mxu0 %v57
  %77 = vmatprep.subr.bf16.mxu0 0
  %78 = vmatpush1.bf16.msra.mxu0 %v56
  %79 = vmatprep.subr.bf16.mxu0 0
  %80 = vmatpush1.bf16.msra.mxu0 %v55
  %81 = vmatprep.subr.bf16.mxu0 0
  %82 = vmatpush2.bf16.msra.mxu0 0
  %83 = vmatprep.subr.bf16.mxu0 0
  %84 = vmatpush2.bf16.msra.mxu0 0
  %85 = vmatprep.subr.bf16.mxu0 0
  %86 = vmatpush2.bf16.msra.mxu0 0
  %87 = vmatprep.subr.bf16.mxu0 0
  %88 = vmatpush2.bf16.msra.mxu0 0
  %89 = vmatprep.subr.bf16.mxu0 0
  %90 = vmatpush2.bf16.msra.mxu0 0
  %91 = vmatprep.subr.bf16.mxu0 0
  %92 = vmatpush2.bf16.msra.mxu0 0
  %93 = vmatprep.subr.bf16.mxu0 0
  %94 = vmatpush2.bf16.msra.mxu0 0
  %95 = vmatprep.subr.bf16.mxu0 0
  %96 = vmatpush2.bf16.msra.mxu0 0
  %97 = vmatprep.mubr.bf16.mxu0 0
  %98 = vmatmul.mubr.bf16.gmra.mxu0 %v63
  %v99 = vpop.f32.mrf.mxu0
  %v100 = vadd.f32 %v31, %v99
  %v101 = vpop.f32.mrf.mxu0
  %v102 = vpop.f32.mrf.mxu0
  %v103 = vadd.f32 %v36, %v102
  %v104 = vpop.f32.mrf.mxu0
  %105 = vdwg.mxu0
  %v106 = vld [vmem:[%s3] sm:$0xf]
  %v107 = vld [vmem:[%s3 + $0x4] sm:$0xf]
  %v108 = vunpack.c.l.bf16 %v106
  %v109 = vunpack.c.l.bf16 %v107
  %v110 = vadd.f32 %v100, %v108
  %v111 = vadd.f32 %v103, %v109
  %v112 = vpack.c.bf16 %v111, %v110
  %v114 = vunpack.c.l.b16 %v112
  %v115 = vunpack.c.h.b16 %v112
  %v116 = vpack.c.b16 %v114, %v114
  %v117 = vpack.c.b16 %v115, %v115
  %vm120 = vcmask 257024
  %121 = vst.msk [vmem:[%s4] sm:$0xf] %vm120, %v116
  %122 = vst.msk [vmem:[%s4 + $0x4] sm:$0xf] %vm120, %v117
  // Predicated region
  $region18: #{_lambda_.22} parent=0 // pred_check
    _
  $region19: #{_lambda_.22} parent=0 // pred_check_branch
    %124 = sbr.rel (0) target = $region21
  $region20: #{_lambda_.22} parent=0 // pred_region
    _
  $region21: #{_lambda_.22} parent=0 // pred_fallthru
    _
  // Predicated region
  $region22: #{_lambda_.22} parent=0 // pred_check
    _
  $region23: #{_lambda_.22} parent=0 // pred_check_branch
    %126 = sbr.rel (0) target = $region25
  $region24: #{_lambda_.22} parent=0 // pred_region
    _
  $region25: #{_lambda_.22} parent=0 // pred_fallthru
    _

</llo_original>
